<compile_context>
chip_gen: v6e
topology: v6e:2x2x1
jax: 0.10.0
libtpu: 0.0.40
codegen_flags: <defaults>
</compile_context>

<pallas_src>
import functools

import jax
import jax.numpy as jnp
from jax import lax
from jax.experimental import pallas as pl
from jax.experimental.pallas import tpu as pltpu

LEAKY_SLOPE = 0.2
BN_EPS = 1e-5
TAU = 0.5


# --------------------------------------------------------------------------
# in-kernel helpers (traced inside the Pallas kernels)
# --------------------------------------------------------------------------

def _leaky_relu(v):
    return jnp.where(v > 0, v, LEAKY_SLOPE * v)


def _shift_rows(x, dy, h):
    """out[n, hh] = x[n, hh + dy] (zero outside the image); rows are packed (N*H, L)."""
    if dy == 0:
        return x
    r, l = x.shape
    zrow = jnp.zeros((1, l), x.dtype)
    if dy == 1:
        shifted = jnp.concatenate([x[1:, :], zrow], axis=0)
    else:
        shifted = jnp.concatenate([zrow, x[:-1, :]], axis=0)
    hh = lax.broadcasted_iota(jnp.int32, (r, l), 0) % h
    valid = (hh < h - 1) if dy == 1 else (hh > 0)
    return jnp.where(valid, shifted, 0.0)


def _shift_cols(x, dx, c):
    """out[.., ww*c+cc] = x[.., (ww+dx)*c+cc] (zero outside); lanes are packed W*C."""
    if dx == 0:
        return x
    r, l = x.shape
    zcol = jnp.zeros((r, c), x.dtype)
    if dx == 1:
        return jnp.concatenate([x[:, c:], zcol], axis=1)
    return jnp.concatenate([zcol, x[:, :l - c]], axis=1)


def _im2col_packed(x, h, w, c):
    """(N*H, W*C) -> (N*H, 9*W*C): the nine zero-padded 3x3 taps concatenated along K."""
    taps = []
    for dy in (-1, 0, 1):
        xr = _shift_rows(x, dy, h)
        for dx in (-1, 0, 1):
            taps.append(_shift_cols(xr, dx, c))
    return jnp.concatenate(taps, axis=1)


def _channel_fold(v, c, w):
    """Sum the W lane-groups (stride c); result broadcast back over W.  W must be 2^k."""
    step = c
    while step < c * w:
        v = v + pltpu.roll(v, shift=step, axis=1)
        step *= 2
    return v


def _bn_packed(y, gamma_p, beta_p, c, w, inv_count):
    """Training-mode BatchNorm2d (biased var, eps) on packed (N*H, W*C) activations.
    One-pass stats: per-channel sum and sum-of-squares."""
    s1 = jnp.sum(_channel_fold(y, c, w), axis=0, keepdims=True)
    s2 = jnp.sum(_channel_fold(y * y, c, w), axis=0, keepdims=True)
    mean = s1 * inv_count
    var = s2 * inv_count - mean * mean
    scale = lax.rsqrt(var + BN_EPS) * gamma_p
    return (y - mean) * scale + beta_p


# --------------------------------------------------------------------------
# Kernel 1: ResBlock (encoder stand-in), fully packed / lane-dense
# --------------------------------------------------------------------------

def _resblock_kernel(x_ref, w1_ref, w2_ref, g1_ref, b1_ref, g2_ref, b2_ref,
                     gsc_ref, bsc_ref, o_ref, *, h, w, cin, cout):
    wco = w * cout
    inv_count = 1.0 / float(x_ref.shape[0] * w)            # 1 / (N*H*W)

    x = x_ref[...]                                          # (N*H, W*Cin), a few vregs

    # conv1 (3x3) and the folded 1x1 skip: ONE matmul, K = 9*W*Cin, N = 2*W*Cout
    a1 = _im2col_packed(x, h, w, cin)
    mm1 = jnp.dot(a1, w1_ref[...], preferred_element_type=jnp.float32)
    y1 = mm1[:, :wco]
    ident = mm1[:, wco:]

    y1 = _leaky_relu(_bn_packed(y1, g1_ref[...], b1_ref[...], cout, w, inv_count))
    ident = _bn_packed(ident, gsc_ref[...], bsc_ref[...], cout, w, inv_count)

    # conv2 (3x3): ONE matmul, K = 9*W*Cout  (no padded scratch round trip)
    a2 = _im2col_packed(y1, h, w, cout)
    y2 = jnp.dot(a2, w2_ref[...], preferred_element_type=jnp.float32)
    y2 = _bn_packed(y2, g2_ref[...], b2_ref[...], cout, w, inv_count)

    # 128-lane dense output store; (W, Cout) un-merge happens in the wrapper.
    o_ref[...] = _leaky_relu(y2 + ident).astype(o_ref.dtype)


# ---- wrapper-side weight packing (XLA glue) --------------------------------

def _block_diag(wk, w):
    """wk: (C, O) -> (W*C, W*O) block-diagonal with W copies of wk."""
    c, o = wk.shape
    eye = jnp.eye(w, dtype=wk.dtype)
    return jnp.einsum('uv,co->ucvo', eye, wk).reshape(w * c, w * o)


def _pack_conv3x3(w3x3, w):
    """(3,3,C,O) HWIO -> (9*W*C, W*O), tap blocks stacked (ky, kx) row-major."""
    blocks = [_block_diag(w3x3[ky, kx], w) for ky in range(3) for kx in range(3)]
    return jnp.concatenate(blocks, axis=0)


def _pack_skip1x1(wsc, w):
    """(C, O) 1x1 conv -> (9*W*C, W*O), nonzero only on the center-tap rows."""
    bd = _block_diag(wsc, w)
    z = jnp.zeros_like(bd)
    return jnp.concatenate([bd if k == 4 else z for k in range(9)], axis=0)


def _tile_cparam(p, w):
    """Per-channel (C,) param -> (1, W*C) packed layout (value gamma[c] at lane w*C+c)."""
    return jnp.tile(p.reshape(1, -1), (1, w)).astype(jnp.float32)


def _resblock_pallas(x_nchw, w1, g1, b1, w2, g2, b2, wsc, gsc, bsc):
    n, cin, h, w = x_nchw.shape
    cout = w1.shape[-1]
    assert w > 0 and (w & (w - 1)) == 0, "packed BN lane reduction assumes W is a power of two"

    x_pack = jnp.transpose(x_nchw, (0, 2, 3, 1)).reshape(n * h, w * cin).astype(jnp.float32)
    w1aug = jnp.concatenate([_pack_conv3x3(w1, w), _pack_skip1x1(wsc, w)], axis=1)
    w2big = _pack_conv3x3(w2, w)

    vmem = pl.BlockSpec(memory_space=pltpu.MemorySpace.VMEM)
    kernel = functools.partial(_resblock_kernel, h=h, w=w, cin=cin, cout=cout)
    out_pack = pl.pallas_call(
        kernel,
        out_shape=jax.ShapeDtypeStruct((n * h, w * cout), jnp.float32),
        in_specs=[vmem] * 9,
        out_specs=vmem,
    )(x_pack, w1aug.astype(jnp.float32), w2big.astype(jnp.float32),
      _tile_cparam(g1, w), _tile_cparam(b1, w),
      _tile_cparam(g2, w), _tile_cparam(b2, w),
      _tile_cparam(gsc, w), _tile_cparam(bsc, w))

    # un-merge the lane-dense (W*Cout) axis and return NCHW (wrapper-side layout plumbing)
    return jnp.transpose(out_pack.reshape(n, h, w, cout), (0, 3, 1, 2))


# --------------------------------------------------------------------------
# Kernel 2: Qy_x head = Linear(1024, dim_y) + softmax + soft gumbel-softmax
# --------------------------------------------------------------------------

def _qyx_head_kernel(f_ref, wfc_ref, bfc_ref, u_ref, logits_ref, qy_ref, pi_ref, *, tau):
    logits = jnp.dot(f_ref[...], wfc_ref[...],
                     preferred_element_type=jnp.float32) + bfc_ref[...]
    logits_ref[...] = logits

    m = jnp.max(logits, axis=-1, keepdims=True)
    e = jnp.exp(logits - m)
    pi_ref[...] = e / jnp.sum(e, axis=-1, keepdims=True)

    gmb = -jnp.log(-jnp.log(u_ref[...]))                    # Gumbel(0,1) from uniform input
    z = (logits + gmb) * (1.0 / tau)
    mz = jnp.max(z, axis=-1, keepdims=True)
    ez = jnp.exp(z - mz)
    qy_ref[...] = ez / jnp.sum(ez, axis=-1, keepdims=True)


def _qyx_head_pallas(feat, wfc, bfc, u):
    b = feat.shape[0]
    dim_y = wfc.shape[-1]
    vmem = pl.BlockSpec(memory_space=pltpu.MemorySpace.VMEM)
    kernel = functools.partial(_qyx_head_kernel, tau=TAU)
    out_sd = jax.ShapeDtypeStruct((b, dim_y), jnp.float32)
    logits, qy, pi = pl.pallas_call(
        kernel,
        out_shape=(out_sd, out_sd, out_sd),
        in_specs=[vmem] * 4,
        out_specs=(vmem, vmem, vmem),
    )(feat.astype(jnp.float32), wfc.astype(jnp.float32),
      bfc.reshape(1, dim_y).astype(jnp.float32), u.astype(jnp.float32))
    return qy, pi, logits


# --------------------------------------------------------------------------
# Full Qy_x forward
# --------------------------------------------------------------------------

@jax.jit
def qy_x_forward(x, w1, g1, b1, w2, g2, b2, wsc, gsc, bsc, wfc, bfc, u):
    feat_map = _resblock_pallas(x, w1, g1, b1, w2, g2, b2, wsc, gsc, bsc)   # (N, Cout, H, W)
    feat = feat_map.reshape(feat_map.shape[0], -1)                          # NCHW flatten -> (N, 1024)
    return _qyx_head_pallas(feat, wfc, bfc, u)                              # (qy, pi, logits)


# --------------------------------------------------------------------------
# pure-JAX reference (same semantics, default matmul/conv precision)
# --------------------------------------------------------------------------

def _reference(x, w1, g1, b1, w2, g2, b2, wsc, gsc, bsc, wfc, bfc, u):
    xh = jnp.transpose(x, (0, 2, 3, 1)).astype(jnp.float32)
    dn = ("NHWC", "HWIO", "NHWC")
    prec = lax.Precision.DEFAULT

    def bn(y, g, b):
        m = jnp.mean(y, axis=(0, 1, 2), keepdims=True)
        v = jnp.mean((y - m) ** 2, axis=(0, 1, 2), keepdims=True)
        return (y - m) * lax.rsqrt(v + BN_EPS) * g + b

    def lrelu(v):
        return jnp.where(v > 0, v, LEAKY_SLOPE * v)

    y = lax.conv_general_dilated(xh, w1, (1, 1), "SAME", dimension_numbers=dn, precision=prec)
    y = lrelu(bn(y, g1, b1))
    y = lax.conv_general_dilated(y, w2, (1, 1), "SAME", dimension_numbers=dn, precision=prec)
    y = bn(y, g2, b2)
    ident = lax.conv_general_dilated(xh, wsc.reshape(1, 1, *wsc.shape), (1, 1), "SAME",
                                     dimension_numbers=dn, precision=prec)
    ident = bn(ident, gsc, bsc)
    feat = lrelu(y + ident)
    feat = jnp.transpose(feat, (0, 3, 1, 2)).reshape(x.shape[0], -1)        # NCHW flatten

    logits = feat @ wfc + bfc
    pi = jax.nn.softmax(logits, axis=-1)
    gmb = -jnp.log(-jnp.log(u))
    qy = jax.nn.softmax((logits + gmb) / TAU, axis=-1)
    return qy, pi, logits


# --------------------------------------------------------------------------

if __name__ == "__main__":
    # encoder output = COUT*H*W = 8*8*16 = 1024 features, matching nn.Linear(1024, dim_y)
    N, CIN, COUT, H, W = 2, 4, 8, 8, 16
    DIM_Y = 10
    assert COUT * H * W == 1024

    key = jax.random.PRNGKey(0)
    ks = jax.random.split(key, 13)
    x = jax.random.normal(ks[0], (N, CIN, H, W), jnp.float32)

    w1 = 0.2 * jax.random.normal(ks[1], (3, 3, CIN, COUT), jnp.float32)     # HWIO
    w2 = 0.2 * jax.random.normal(ks[2], (3, 3, COUT, COUT), jnp.float32)
    wsc = 0.2 * jax.random.normal(ks[3], (CIN, COUT), jnp.float32)          # 1x1 skip conv
    g1 = 1.0 + 0.1 * jax.random.normal(ks[4], (COUT,), jnp.float32)
    b1 = 0.1 * jax.random.normal(ks[5], (COUT,), jnp.float32)
    g2 = 1.0 + 0.1 * jax.random.normal(ks[6], (COUT,), jnp.float32)
    b2 = 0.1 * jax.random.normal(ks[7], (COUT,), jnp.float32)
    gsc = 1.0 + 0.1 * jax.random.normal(ks[8], (COUT,), jnp.float32)
    bsc = 0.1 * jax.random.normal(ks[9], (COUT,), jnp.float32)
    wfc = 0.03 * jax.random.normal(ks[10], (COUT * H * W, DIM_Y), jnp.float32)
    bfc = 0.1 * jax.random.normal(ks[11], (DIM_Y,), jnp.float32)
    u = jax.random.uniform(ks[12], (N, DIM_Y), jnp.float32, minval=1e-6, maxval=1.0)

    qy, pi, logits = qy_x_forward(x, w1, g1, b1, w2, g2, b2, wsc, gsc, bsc, wfc, bfc, u)
    qy = jax.block_until_ready(qy)

    qy_r, pi_r, logits_r = _reference(x, w1, g1, b1, w2, g2, b2, wsc, gsc, bsc, wfc, bfc, u)

    assert qy.shape == (N, DIM_Y) and pi.shape == (N, DIM_Y) and logits.shape == (N, DIM_Y)
    assert float(jnp.max(jnp.abs(logits - logits_r))) < 5e-2
    assert float(jnp.max(jnp.abs(qy - qy_r))) < 2e-2
    assert float(jnp.max(jnp.abs(pi - pi_r))) < 2e-2
    assert float(jnp.max(jnp.abs(jnp.sum(qy, axis=-1) - 1.0))) < 1e-4

    print("KERNEL_OK")
</pallas_src>

<mosaic_0001>
module attributes {stable_mosaic.version = 11 : i64} {
  func.func @_resblock_kernel(%arg0: memref<16x64xf32, #tpu.memory_space<vmem>>, %arg1: memref<576x256xf32, #tpu.memory_space<vmem>>, %arg2: memref<1152x128xf32, #tpu.memory_space<vmem>>, %arg3: memref<1x128xf32, #tpu.memory_space<vmem>>, %arg4: memref<1x128xf32, #tpu.memory_space<vmem>>, %arg5: memref<1x128xf32, #tpu.memory_space<vmem>>, %arg6: memref<1x128xf32, #tpu.memory_space<vmem>>, %arg7: memref<1x128xf32, #tpu.memory_space<vmem>>, %arg8: memref<1x128xf32, #tpu.memory_space<vmem>>, %arg9: memref<16x128xf32, #tpu.memory_space<vmem>>) attributes {dimension_semantics = [], scalar_prefetch = 0 : i64, scratch_operands = 0 : i64, tpu.core_type = #tpu.core_type<tc>} {
    %c0 = arith.constant 0 : index
    %c0_0 = arith.constant 0 : index
    %0 = vector.load %arg0[%c0, %c0_0] : memref<16x64xf32, #tpu.memory_space<vmem>>, vector<16x64xf32>
    %cst = arith.constant 0.000000e+00 : f32
    %1 = vector.broadcast %cst : f32 to vector<1x64xf32>
    %2 = vector.extract_strided_slice %0 {offsets = [0, 0], sizes = [15, 64], strides = [1, 1]} : vector<16x64xf32> to vector<15x64xf32>
    %3 = tpu.concatenate %1, %2 in 0 : vector<1x64xf32>, vector<15x64xf32> -> vector<16x64xf32>
    %4 = tpu.iota {dimensions = array<i32: 0>} : vector<16x64xi32>
    %c8_i32 = arith.constant 8 : i32
    %c0_i32 = arith.constant 0 : i32
    %5 = arith.cmpi eq, %c8_i32, %c0_i32 : i32
    %c1_i32 = arith.constant 1 : i32
    %6 = arith.select %5, %c1_i32, %c8_i32 : i32
    %7 = vector.broadcast %6 : i32 to vector<16x64xi32>
    %8 = arith.remsi %4, %7 : vector<16x64xi32>
    %c0_i32_1 = arith.constant 0 : i32
    %9 = vector.broadcast %c0_i32_1 : i32 to vector<16x64xi32>
    %10 = arith.cmpi ne, %8, %9 : vector<16x64xi32>
    %c0_i32_2 = arith.constant 0 : i32
    %11 = vector.broadcast %c0_i32_2 : i32 to vector<16x64xi32>
    %12 = arith.cmpi slt, %8, %11 : vector<16x64xi32>
    %c0_i32_3 = arith.constant 0 : i32
    %13 = arith.cmpi slt, %6, %c0_i32_3 : i32
    %14 = vector.broadcast %13 : i1 to vector<16x64xi1>
    %15 = vector.broadcast %14 : vector<16x64xi1> to vector<16x64xi1>
    %16 = arith.xori %12, %15 : vector<16x64xi1>
    %17 = arith.andi %16, %10 : vector<16x64xi1>
    %18 = vector.broadcast %6 : i32 to vector<16x64xi32>
    %19 = arith.addi %8, %18 : vector<16x64xi32>
    %20 = arith.select %17, %19, %8 : vector<16x64xi1>, vector<16x64xi32>
    %c0_i32_4 = arith.constant 0 : i32
    %21 = vector.broadcast %c0_i32_4 : i32 to vector<16x64xi32>
    %22 = arith.cmpi sgt, %20, %21 : vector<16x64xi32>
    %cst_5 = arith.constant 0.000000e+00 : f32
    %23 = vector.broadcast %cst_5 : f32 to vector<16x64xf32>
    %24 = arith.select %22, %3, %23 : vector<16x64xi1>, vector<16x64xf32>
    %cst_6 = arith.constant 0.000000e+00 : f32
    %25 = vector.broadcast %cst_6 : f32 to vector<16x4xf32>
    %26 = vector.extract_strided_slice %24 {offsets = [0, 0], sizes = [16, 60], strides = [1, 1]} : vector<16x64xf32> to vector<16x60xf32>
    %27 = tpu.concatenate %25, %26 in 1 : vector<16x4xf32>, vector<16x60xf32> -> vector<16x64xf32>
    %cst_7 = arith.constant 0.000000e+00 : f32
    %28 = vector.broadcast %cst_7 : f32 to vector<16x4xf32>
    %29 = vector.extract_strided_slice %24 {offsets = [0, 4], sizes = [16, 60], strides = [1, 1]} : vector<16x64xf32> to vector<16x60xf32>
    %30 = tpu.concatenate %29, %28 in 1 : vector<16x60xf32>, vector<16x4xf32> -> vector<16x64xf32>
    %cst_8 = arith.constant 0.000000e+00 : f32
    %31 = vector.broadcast %cst_8 : f32 to vector<16x4xf32>
    %32 = vector.extract_strided_slice %0 {offsets = [0, 0], sizes = [16, 60], strides = [1, 1]} : vector<16x64xf32> to vector<16x60xf32>
    %33 = tpu.concatenate %31, %32 in 1 : vector<16x4xf32>, vector<16x60xf32> -> vector<16x64xf32>
    %cst_9 = arith.constant 0.000000e+00 : f32
    %34 = vector.broadcast %cst_9 : f32 to vector<16x4xf32>
    %35 = vector.extract_strided_slice %0 {offsets = [0, 4], sizes = [16, 60], strides = [1, 1]} : vector<16x64xf32> to vector<16x60xf32>
    %36 = tpu.concatenate %35, %34 in 1 : vector<16x60xf32>, vector<16x4xf32> -> vector<16x64xf32>
    %cst_10 = arith.constant 0.000000e+00 : f32
    %37 = vector.broadcast %cst_10 : f32 to vector<1x64xf32>
    %38 = vector.extract_strided_slice %0 {offsets = [1, 0], sizes = [15, 64], strides = [1, 1]} : vector<16x64xf32> to vector<15x64xf32>
    %39 = tpu.concatenate %38, %37 in 0 : vector<15x64xf32>, vector<1x64xf32> -> vector<16x64xf32>
    %40 = tpu.iota {dimensions = array<i32: 0>} : vector<16x64xi32>
    %c8_i32_11 = arith.constant 8 : i32
    %c0_i32_12 = arith.constant 0 : i32
    %41 = arith.cmpi eq, %c8_i32_11, %c0_i32_12 : i32
    %c1_i32_13 = arith.constant 1 : i32
    %42 = arith.select %41, %c1_i32_13, %c8_i32_11 : i32
    %43 = vector.broadcast %42 : i32 to vector<16x64xi32>
    %44 = arith.remsi %40, %43 : vector<16x64xi32>
    %c0_i32_14 = arith.constant 0 : i32
    %45 = vector.broadcast %c0_i32_14 : i32 to vector<16x64xi32>
    %46 = arith.cmpi ne, %44, %45 : vector<16x64xi32>
    %c0_i32_15 = arith.constant 0 : i32
    %47 = vector.broadcast %c0_i32_15 : i32 to vector<16x64xi32>
    %48 = arith.cmpi slt, %44, %47 : vector<16x64xi32>
    %c0_i32_16 = arith.constant 0 : i32
    %49 = arith.cmpi slt, %42, %c0_i32_16 : i32
    %50 = vector.broadcast %49 : i1 to vector<16x64xi1>
    %51 = vector.broadcast %50 : vector<16x64xi1> to vector<16x64xi1>
    %52 = arith.xori %48, %51 : vector<16x64xi1>
    %53 = arith.andi %52, %46 : vector<16x64xi1>
    %54 = vector.broadcast %42 : i32 to vector<16x64xi32>
    %55 = arith.addi %44, %54 : vector<16x64xi32>
    %56 = arith.select %53, %55, %44 : vector<16x64xi1>, vector<16x64xi32>
    %c7_i32 = arith.constant 7 : i32
    %57 = vector.broadcast %c7_i32 : i32 to vector<16x64xi32>
    %58 = arith.cmpi slt, %56, %57 : vector<16x64xi32>
    %cst_17 = arith.constant 0.000000e+00 : f32
    %59 = vector.broadcast %cst_17 : f32 to vector<16x64xf32>
    %60 = arith.select %58, %39, %59 : vector<16x64xi1>, vector<16x64xf32>
    %cst_18 = arith.constant 0.000000e+00 : f32
    %61 = vector.broadcast %cst_18 : f32 to vector<16x4xf32>
    %62 = vector.extract_strided_slice %60 {offsets = [0, 0], sizes = [16, 60], strides = [1, 1]} : vector<16x64xf32> to vector<16x60xf32>
    %63 = tpu.concatenate %61, %62 in 1 : vector<16x4xf32>, vector<16x60xf32> -> vector<16x64xf32>
    %cst_19 = arith.constant 0.000000e+00 : f32
    %64 = vector.broadcast %cst_19 : f32 to vector<16x4xf32>
    %65 = vector.extract_strided_slice %60 {offsets = [0, 4], sizes = [16, 60], strides = [1, 1]} : vector<16x64xf32> to vector<16x60xf32>
    %66 = tpu.concatenate %65, %64 in 1 : vector<16x60xf32>, vector<16x4xf32> -> vector<16x64xf32>
    %67 = tpu.concatenate %27, %24, %30, %33, %0, %36, %63, %60, %66 in 1 : vector<16x64xf32>, vector<16x64xf32>, vector<16x64xf32>, vector<16x64xf32>, vector<16x64xf32>, vector<16x64xf32>, vector<16x64xf32>, vector<16x64xf32>, vector<16x64xf32> -> vector<16x576xf32>
    %c0_20 = arith.constant 0 : index
    %c0_21 = arith.constant 0 : index
    %68 = vector.load %arg1[%c0_20, %c0_21] : memref<576x256xf32, #tpu.memory_space<vmem>>, vector<576x256xf32>
    %cst_22 = arith.constant dense<0.000000e+00> : vector<16x256xf32>
    %69 = tpu.matmul %67, %68, %cst_22 {dimension_numbers = #tpu.dot_dimension_numbers<[1], [0], [0], [1], [0, 0, 1, 1], [], []>} : vector<16x576xf32>, vector<576x256xf32>, vector<16x256xf32> -> vector<16x256xf32>
    %70 = vector.extract_strided_slice %69 {offsets = [0, 0], sizes = [16, 128], strides = [1, 1]} : vector<16x256xf32> to vector<16x128xf32>
    %71 = vector.extract_strided_slice %69 {offsets = [0, 128], sizes = [16, 128], strides = [1, 1]} : vector<16x256xf32> to vector<16x128xf32>
    %c0_23 = arith.constant 0 : index
    %c0_24 = arith.constant 0 : index
    %72 = vector.load %arg3[%c0_23, %c0_24] : memref<1x128xf32, #tpu.memory_space<vmem>>, vector<1x128xf32>
    %c0_25 = arith.constant 0 : index
    %c0_26 = arith.constant 0 : index
    %73 = vector.load %arg4[%c0_25, %c0_26] : memref<1x128xf32, #tpu.memory_space<vmem>>, vector<1x128xf32>
    %c8_i32_27 = arith.constant 8 : i32
    %74 = tpu.dynamic_rotate %70 by %c8_i32_27 dim 1 : vector<16x128xf32>, i32 -> vector<16x128xf32>
    %75 = arith.addf %70, %74 : vector<16x128xf32>
    %c16_i32 = arith.constant 16 : i32
    %76 = tpu.dynamic_rotate %75 by %c16_i32 dim 1 : vector<16x128xf32>, i32 -> vector<16x128xf32>
    %77 = arith.addf %75, %76 : vector<16x128xf32>
    %c32_i32 = arith.constant 32 : i32
    %78 = tpu.dynamic_rotate %77 by %c32_i32 dim 1 : vector<16x128xf32>, i32 -> vector<16x128xf32>
    %79 = arith.addf %77, %78 : vector<16x128xf32>
    %c64_i32 = arith.constant 64 : i32
    %80 = tpu.dynamic_rotate %79 by %c64_i32 dim 1 : vector<16x128xf32>, i32 -> vector<16x128xf32>
    %81 = arith.addf %79, %80 : vector<16x128xf32>
    %cst_28 = arith.constant dense<0.000000e+00> : vector<128xf32>
    %82 = vector.multi_reduction <add>, %81, %cst_28 [0] : vector<16x128xf32> to vector<128xf32>
    %83 = vector.shape_cast %82 : vector<128xf32> to vector<1x128xf32>
    %84 = arith.mulf %70, %70 : vector<16x128xf32>
    %c8_i32_29 = arith.constant 8 : i32
    %85 = tpu.dynamic_rotate %84 by %c8_i32_29 dim 1 : vector<16x128xf32>, i32 -> vector<16x128xf32>
    %86 = arith.addf %84, %85 : vector<16x128xf32>
    %c16_i32_30 = arith.constant 16 : i32
    %87 = tpu.dynamic_rotate %86 by %c16_i32_30 dim 1 : vector<16x128xf32>, i32 -> vector<16x128xf32>
    %88 = arith.addf %86, %87 : vector<16x128xf32>
    %c32_i32_31 = arith.constant 32 : i32
    %89 = tpu.dynamic_rotate %88 by %c32_i32_31 dim 1 : vector<16x128xf32>, i32 -> vector<16x128xf32>
    %90 = arith.addf %88, %89 : vector<16x128xf32>
    %c64_i32_32 = arith.constant 64 : i32
    %91 = tpu.dynamic_rotate %90 by %c64_i32_32 dim 1 : vector<16x128xf32>, i32 -> vector<16x128xf32>
    %92 = arith.addf %90, %91 : vector<16x128xf32>
    %cst_33 = arith.constant dense<0.000000e+00> : vector<128xf32>
    %93 = vector.multi_reduction <add>, %92, %cst_33 [0] : vector<16x128xf32> to vector<128xf32>
    %94 = vector.shape_cast %93 : vector<128xf32> to vector<1x128xf32>
    %cst_34 = arith.constant 3.906250e-03 : f32
    %95 = vector.broadcast %cst_34 : f32 to vector<1x128xf32>
    %96 = arith.mulf %83, %95 : vector<1x128xf32>
    %cst_35 = arith.constant 3.906250e-03 : f32
    %97 = vector.broadcast %cst_35 : f32 to vector<1x128xf32>
    %98 = arith.mulf %94, %97 : vector<1x128xf32>
    %99 = arith.mulf %96, %96 : vector<1x128xf32>
    %100 = arith.subf %98, %99 : vector<1x128xf32>
    %cst_36 = arith.constant 9.99999974E-6 : f32
    %101 = vector.broadcast %cst_36 : f32 to vector<1x128xf32>
    %102 = arith.addf %100, %101 : vector<1x128xf32>
    %103 = math.rsqrt %102 : vector<1x128xf32>
    %104 = arith.mulf %103, %72 : vector<1x128xf32>
    %105 = vector.broadcast %96 : vector<1x128xf32> to vector<16x128xf32>
    %106 = arith.subf %70, %105 : vector<16x128xf32>
    %107 = vector.broadcast %104 : vector<1x128xf32> to vector<16x128xf32>
    %108 = arith.mulf %106, %107 : vector<16x128xf32>
    %109 = vector.broadcast %73 : vector<1x128xf32> to vector<16x128xf32>
    %110 = arith.addf %108, %109 : vector<16x128xf32>
    %cst_37 = arith.constant 0.000000e+00 : f32
    %111 = vector.broadcast %cst_37 : f32 to vector<16x128xf32>
    %112 = arith.cmpf ogt, %110, %111 : vector<16x128xf32>
    %cst_38 = arith.constant 2.000000e-01 : f32
    %113 = vector.broadcast %cst_38 : f32 to vector<16x128xf32>
    %114 = arith.mulf %113, %110 : vector<16x128xf32>
    %115 = arith.select %112, %110, %114 : vector<16x128xi1>, vector<16x128xf32>
    %c0_39 = arith.constant 0 : index
    %c0_40 = arith.constant 0 : index
    %116 = vector.load %arg7[%c0_39, %c0_40] : memref<1x128xf32, #tpu.memory_space<vmem>>, vector<1x128xf32>
    %c0_41 = arith.constant 0 : index
    %c0_42 = arith.constant 0 : index
    %117 = vector.load %arg8[%c0_41, %c0_42] : memref<1x128xf32, #tpu.memory_space<vmem>>, vector<1x128xf32>
    %c8_i32_43 = arith.constant 8 : i32
    %118 = tpu.dynamic_rotate %71 by %c8_i32_43 dim 1 : vector<16x128xf32>, i32 -> vector<16x128xf32>
    %119 = arith.addf %71, %118 : vector<16x128xf32>
    %c16_i32_44 = arith.constant 16 : i32
    %120 = tpu.dynamic_rotate %119 by %c16_i32_44 dim 1 : vector<16x128xf32>, i32 -> vector<16x128xf32>
    %121 = arith.addf %119, %120 : vector<16x128xf32>
    %c32_i32_45 = arith.constant 32 : i32
    %122 = tpu.dynamic_rotate %121 by %c32_i32_45 dim 1 : vector<16x128xf32>, i32 -> vector<16x128xf32>
    %123 = arith.addf %121, %122 : vector<16x128xf32>
    %c64_i32_46 = arith.constant 64 : i32
    %124 = tpu.dynamic_rotate %123 by %c64_i32_46 dim 1 : vector<16x128xf32>, i32 -> vector<16x128xf32>
    %125 = arith.addf %123, %124 : vector<16x128xf32>
    %cst_47 = arith.constant dense<0.000000e+00> : vector<128xf32>
    %126 = vector.multi_reduction <add>, %125, %cst_47 [0] : vector<16x128xf32> to vector<128xf32>
    %127 = vector.shape_cast %126 : vector<128xf32> to vector<1x128xf32>
    %128 = arith.mulf %71, %71 : vector<16x128xf32>
    %c8_i32_48 = arith.constant 8 : i32
    %129 = tpu.dynamic_rotate %128 by %c8_i32_48 dim 1 : vector<16x128xf32>, i32 -> vector<16x128xf32>
    %130 = arith.addf %128, %129 : vector<16x128xf32>
    %c16_i32_49 = arith.constant 16 : i32
    %131 = tpu.dynamic_rotate %130 by %c16_i32_49 dim 1 : vector<16x128xf32>, i32 -> vector<16x128xf32>
    %132 = arith.addf %130, %131 : vector<16x128xf32>
    %c32_i32_50 = arith.constant 32 : i32
    %133 = tpu.dynamic_rotate %132 by %c32_i32_50 dim 1 : vector<16x128xf32>, i32 -> vector<16x128xf32>
    %134 = arith.addf %132, %133 : vector<16x128xf32>
    %c64_i32_51 = arith.constant 64 : i32
    %135 = tpu.dynamic_rotate %134 by %c64_i32_51 dim 1 : vector<16x128xf32>, i32 -> vector<16x128xf32>
    %136 = arith.addf %134, %135 : vector<16x128xf32>
    %cst_52 = arith.constant dense<0.000000e+00> : vector<128xf32>
    %137 = vector.multi_reduction <add>, %136, %cst_52 [0] : vector<16x128xf32> to vector<128xf32>
    %138 = vector.shape_cast %137 : vector<128xf32> to vector<1x128xf32>
    %cst_53 = arith.constant 3.906250e-03 : f32
    %139 = vector.broadcast %cst_53 : f32 to vector<1x128xf32>
    %140 = arith.mulf %127, %139 : vector<1x128xf32>
    %cst_54 = arith.constant 3.906250e-03 : f32
    %141 = vector.broadcast %cst_54 : f32 to vector<1x128xf32>
    %142 = arith.mulf %138, %141 : vector<1x128xf32>
    %143 = arith.mulf %140, %140 : vector<1x128xf32>
    %144 = arith.subf %142, %143 : vector<1x128xf32>
    %cst_55 = arith.constant 9.99999974E-6 : f32
    %145 = vector.broadcast %cst_55 : f32 to vector<1x128xf32>
    %146 = arith.addf %144, %145 : vector<1x128xf32>
    %147 = math.rsqrt %146 : vector<1x128xf32>
    %148 = arith.mulf %147, %116 : vector<1x128xf32>
    %149 = vector.broadcast %140 : vector<1x128xf32> to vector<16x128xf32>
    %150 = arith.subf %71, %149 : vector<16x128xf32>
    %151 = vector.broadcast %148 : vector<1x128xf32> to vector<16x128xf32>
    %152 = arith.mulf %150, %151 : vector<16x128xf32>
    %153 = vector.broadcast %117 : vector<1x128xf32> to vector<16x128xf32>
    %154 = arith.addf %152, %153 : vector<16x128xf32>
    %cst_56 = arith.constant 0.000000e+00 : f32
    %155 = vector.broadcast %cst_56 : f32 to vector<1x128xf32>
    %156 = vector.extract_strided_slice %115 {offsets = [0, 0], sizes = [15, 128], strides = [1, 1]} : vector<16x128xf32> to vector<15x128xf32>
    %157 = tpu.concatenate %155, %156 in 0 : vector<1x128xf32>, vector<15x128xf32> -> vector<16x128xf32>
    %158 = tpu.iota {dimensions = array<i32: 0>} : vector<16x128xi32>
    %c8_i32_57 = arith.constant 8 : i32
    %c0_i32_58 = arith.constant 0 : i32
    %159 = arith.cmpi eq, %c8_i32_57, %c0_i32_58 : i32
    %c1_i32_59 = arith.constant 1 : i32
    %160 = arith.select %159, %c1_i32_59, %c8_i32_57 : i32
    %161 = vector.broadcast %160 : i32 to vector<16x128xi32>
    %162 = arith.remsi %158, %161 : vector<16x128xi32>
    %c0_i32_60 = arith.constant 0 : i32
    %163 = vector.broadcast %c0_i32_60 : i32 to vector<16x128xi32>
    %164 = arith.cmpi ne, %162, %163 : vector<16x128xi32>
    %c0_i32_61 = arith.constant 0 : i32
    %165 = vector.broadcast %c0_i32_61 : i32 to vector<16x128xi32>
    %166 = arith.cmpi slt, %162, %165 : vector<16x128xi32>
    %c0_i32_62 = arith.constant 0 : i32
    %167 = arith.cmpi slt, %160, %c0_i32_62 : i32
    %168 = vector.broadcast %167 : i1 to vector<16x128xi1>
    %169 = vector.broadcast %168 : vector<16x128xi1> to vector<16x128xi1>
    %170 = arith.xori %166, %169 : vector<16x128xi1>
    %171 = arith.andi %170, %164 : vector<16x128xi1>
    %172 = vector.broadcast %160 : i32 to vector<16x128xi32>
    %173 = arith.addi %162, %172 : vector<16x128xi32>
    %174 = arith.select %171, %173, %162 : vector<16x128xi1>, vector<16x128xi32>
    %c0_i32_63 = arith.constant 0 : i32
    %175 = vector.broadcast %c0_i32_63 : i32 to vector<16x128xi32>
    %176 = arith.cmpi sgt, %174, %175 : vector<16x128xi32>
    %cst_64 = arith.constant 0.000000e+00 : f32
    %177 = vector.broadcast %cst_64 : f32 to vector<16x128xf32>
    %178 = arith.select %176, %157, %177 : vector<16x128xi1>, vector<16x128xf32>
    %cst_65 = arith.constant 0.000000e+00 : f32
    %179 = vector.broadcast %cst_65 : f32 to vector<16x8xf32>
    %180 = vector.extract_strided_slice %178 {offsets = [0, 0], sizes = [16, 120], strides = [1, 1]} : vector<16x128xf32> to vector<16x120xf32>
    %181 = tpu.concatenate %179, %180 in 1 : vector<16x8xf32>, vector<16x120xf32> -> vector<16x128xf32>
    %cst_66 = arith.constant 0.000000e+00 : f32
    %182 = vector.broadcast %cst_66 : f32 to vector<16x8xf32>
    %183 = vector.extract_strided_slice %178 {offsets = [0, 8], sizes = [16, 120], strides = [1, 1]} : vector<16x128xf32> to vector<16x120xf32>
    %184 = tpu.concatenate %183, %182 in 1 : vector<16x120xf32>, vector<16x8xf32> -> vector<16x128xf32>
    %cst_67 = arith.constant 0.000000e+00 : f32
    %185 = vector.broadcast %cst_67 : f32 to vector<16x8xf32>
    %186 = vector.extract_strided_slice %115 {offsets = [0, 0], sizes = [16, 120], strides = [1, 1]} : vector<16x128xf32> to vector<16x120xf32>
    %187 = tpu.concatenate %185, %186 in 1 : vector<16x8xf32>, vector<16x120xf32> -> vector<16x128xf32>
    %cst_68 = arith.constant 0.000000e+00 : f32
    %188 = vector.broadcast %cst_68 : f32 to vector<16x8xf32>
    %189 = vector.extract_strided_slice %115 {offsets = [0, 8], sizes = [16, 120], strides = [1, 1]} : vector<16x128xf32> to vector<16x120xf32>
    %190 = tpu.concatenate %189, %188 in 1 : vector<16x120xf32>, vector<16x8xf32> -> vector<16x128xf32>
    %cst_69 = arith.constant 0.000000e+00 : f32
    %191 = vector.broadcast %cst_69 : f32 to vector<1x128xf32>
    %192 = vector.extract_strided_slice %115 {offsets = [1, 0], sizes = [15, 128], strides = [1, 1]} : vector<16x128xf32> to vector<15x128xf32>
    %193 = tpu.concatenate %192, %191 in 0 : vector<15x128xf32>, vector<1x128xf32> -> vector<16x128xf32>
    %194 = tpu.iota {dimensions = array<i32: 0>} : vector<16x128xi32>
    %c8_i32_70 = arith.constant 8 : i32
    %c0_i32_71 = arith.constant 0 : i32
    %195 = arith.cmpi eq, %c8_i32_70, %c0_i32_71 : i32
    %c1_i32_72 = arith.constant 1 : i32
    %196 = arith.select %195, %c1_i32_72, %c8_i32_70 : i32
    %197 = vector.broadcast %196 : i32 to vector<16x128xi32>
    %198 = arith.remsi %194, %197 : vector<16x128xi32>
    %c0_i32_73 = arith.constant 0 : i32
    %199 = vector.broadcast %c0_i32_73 : i32 to vector<16x128xi32>
    %200 = arith.cmpi ne, %198, %199 : vector<16x128xi32>
    %c0_i32_74 = arith.constant 0 : i32
    %201 = vector.broadcast %c0_i32_74 : i32 to vector<16x128xi32>
    %202 = arith.cmpi slt, %198, %201 : vector<16x128xi32>
    %c0_i32_75 = arith.constant 0 : i32
    %203 = arith.cmpi slt, %196, %c0_i32_75 : i32
    %204 = vector.broadcast %203 : i1 to vector<16x128xi1>
    %205 = vector.broadcast %204 : vector<16x128xi1> to vector<16x128xi1>
    %206 = arith.xori %202, %205 : vector<16x128xi1>
    %207 = arith.andi %206, %200 : vector<16x128xi1>
    %208 = vector.broadcast %196 : i32 to vector<16x128xi32>
    %209 = arith.addi %198, %208 : vector<16x128xi32>
    %210 = arith.select %207, %209, %198 : vector<16x128xi1>, vector<16x128xi32>
    %c7_i32_76 = arith.constant 7 : i32
    %211 = vector.broadcast %c7_i32_76 : i32 to vector<16x128xi32>
    %212 = arith.cmpi slt, %210, %211 : vector<16x128xi32>
    %cst_77 = arith.constant 0.000000e+00 : f32
    %213 = vector.broadcast %cst_77 : f32 to vector<16x128xf32>
    %214 = arith.select %212, %193, %213 : vector<16x128xi1>, vector<16x128xf32>
    %cst_78 = arith.constant 0.000000e+00 : f32
    %215 = vector.broadcast %cst_78 : f32 to vector<16x8xf32>
    %216 = vector.extract_strided_slice %214 {offsets = [0, 0], sizes = [16, 120], strides = [1, 1]} : vector<16x128xf32> to vector<16x120xf32>
    %217 = tpu.concatenate %215, %216 in 1 : vector<16x8xf32>, vector<16x120xf32> -> vector<16x128xf32>
    %cst_79 = arith.constant 0.000000e+00 : f32
    %218 = vector.broadcast %cst_79 : f32 to vector<16x8xf32>
    %219 = vector.extract_strided_slice %214 {offsets = [0, 8], sizes = [16, 120], strides = [1, 1]} : vector<16x128xf32> to vector<16x120xf32>
    %220 = tpu.concatenate %219, %218 in 1 : vector<16x120xf32>, vector<16x8xf32> -> vector<16x128xf32>
    %221 = tpu.concatenate %181, %178, %184, %187, %115, %190, %217, %214, %220 in 1 : vector<16x128xf32>, vector<16x128xf32>, vector<16x128xf32>, vector<16x128xf32>, vector<16x128xf32>, vector<16x128xf32>, vector<16x128xf32>, vector<16x128xf32>, vector<16x128xf32> -> vector<16x1152xf32>
    %c0_80 = arith.constant 0 : index
    %c0_81 = arith.constant 0 : index
    %222 = vector.load %arg2[%c0_80, %c0_81] : memref<1152x128xf32, #tpu.memory_space<vmem>>, vector<1152x128xf32>
    %cst_82 = arith.constant dense<0.000000e+00> : vector<16x128xf32>
    %223 = tpu.matmul %221, %222, %cst_82 {dimension_numbers = #tpu.dot_dimension_numbers<[1], [0], [0], [1], [0, 0, 1, 1], [], []>} : vector<16x1152xf32>, vector<1152x128xf32>, vector<16x128xf32> -> vector<16x128xf32>
    %c0_83 = arith.constant 0 : index
    %c0_84 = arith.constant 0 : index
    %224 = vector.load %arg5[%c0_83, %c0_84] : memref<1x128xf32, #tpu.memory_space<vmem>>, vector<1x128xf32>
    %c0_85 = arith.constant 0 : index
    %c0_86 = arith.constant 0 : index
    %225 = vector.load %arg6[%c0_85, %c0_86] : memref<1x128xf32, #tpu.memory_space<vmem>>, vector<1x128xf32>
    %c8_i32_87 = arith.constant 8 : i32
    %226 = tpu.dynamic_rotate %223 by %c8_i32_87 dim 1 : vector<16x128xf32>, i32 -> vector<16x128xf32>
    %227 = arith.addf %223, %226 : vector<16x128xf32>
    %c16_i32_88 = arith.constant 16 : i32
    %228 = tpu.dynamic_rotate %227 by %c16_i32_88 dim 1 : vector<16x128xf32>, i32 -> vector<16x128xf32>
    %229 = arith.addf %227, %228 : vector<16x128xf32>
    %c32_i32_89 = arith.constant 32 : i32
    %230 = tpu.dynamic_rotate %229 by %c32_i32_89 dim 1 : vector<16x128xf32>, i32 -> vector<16x128xf32>
    %231 = arith.addf %229, %230 : vector<16x128xf32>
    %c64_i32_90 = arith.constant 64 : i32
    %232 = tpu.dynamic_rotate %231 by %c64_i32_90 dim 1 : vector<16x128xf32>, i32 -> vector<16x128xf32>
    %233 = arith.addf %231, %232 : vector<16x128xf32>
    %cst_91 = arith.constant dense<0.000000e+00> : vector<128xf32>
    %234 = vector.multi_reduction <add>, %233, %cst_91 [0] : vector<16x128xf32> to vector<128xf32>
    %235 = vector.shape_cast %234 : vector<128xf32> to vector<1x128xf32>
    %236 = arith.mulf %223, %223 : vector<16x128xf32>
    %c8_i32_92 = arith.constant 8 : i32
    %237 = tpu.dynamic_rotate %236 by %c8_i32_92 dim 1 : vector<16x128xf32>, i32 -> vector<16x128xf32>
    %238 = arith.addf %236, %237 : vector<16x128xf32>
    %c16_i32_93 = arith.constant 16 : i32
    %239 = tpu.dynamic_rotate %238 by %c16_i32_93 dim 1 : vector<16x128xf32>, i32 -> vector<16x128xf32>
    %240 = arith.addf %238, %239 : vector<16x128xf32>
    %c32_i32_94 = arith.constant 32 : i32
    %241 = tpu.dynamic_rotate %240 by %c32_i32_94 dim 1 : vector<16x128xf32>, i32 -> vector<16x128xf32>
    %242 = arith.addf %240, %241 : vector<16x128xf32>
    %c64_i32_95 = arith.constant 64 : i32
    %243 = tpu.dynamic_rotate %242 by %c64_i32_95 dim 1 : vector<16x128xf32>, i32 -> vector<16x128xf32>
    %244 = arith.addf %242, %243 : vector<16x128xf32>
    %cst_96 = arith.constant dense<0.000000e+00> : vector<128xf32>
    %245 = vector.multi_reduction <add>, %244, %cst_96 [0] : vector<16x128xf32> to vector<128xf32>
    %246 = vector.shape_cast %245 : vector<128xf32> to vector<1x128xf32>
    %cst_97 = arith.constant 3.906250e-03 : f32
    %247 = vector.broadcast %cst_97 : f32 to vector<1x128xf32>
    %248 = arith.mulf %235, %247 : vector<1x128xf32>
    %cst_98 = arith.constant 3.906250e-03 : f32
    %249 = vector.broadcast %cst_98 : f32 to vector<1x128xf32>
    %250 = arith.mulf %246, %249 : vector<1x128xf32>
    %251 = arith.mulf %248, %248 : vector<1x128xf32>
    %252 = arith.subf %250, %251 : vector<1x128xf32>
    %cst_99 = arith.constant 9.99999974E-6 : f32
    %253 = vector.broadcast %cst_99 : f32 to vector<1x128xf32>
    %254 = arith.addf %252, %253 : vector<1x128xf32>
    %255 = math.rsqrt %254 : vector<1x128xf32>
    %256 = arith.mulf %255, %224 : vector<1x128xf32>
    %257 = vector.broadcast %248 : vector<1x128xf32> to vector<16x128xf32>
    %258 = arith.subf %223, %257 : vector<16x128xf32>
    %259 = vector.broadcast %256 : vector<1x128xf32> to vector<16x128xf32>
    %260 = arith.mulf %258, %259 : vector<16x128xf32>
    %261 = vector.broadcast %225 : vector<1x128xf32> to vector<16x128xf32>
    %262 = arith.addf %260, %261 : vector<16x128xf32>
    %263 = arith.addf %262, %154 : vector<16x128xf32>
    %cst_100 = arith.constant 0.000000e+00 : f32
    %264 = vector.broadcast %cst_100 : f32 to vector<16x128xf32>
    %265 = arith.cmpf ogt, %263, %264 : vector<16x128xf32>
    %cst_101 = arith.constant 2.000000e-01 : f32
    %266 = vector.broadcast %cst_101 : f32 to vector<16x128xf32>
    %267 = arith.mulf %266, %263 : vector<16x128xf32>
    %268 = arith.select %265, %263, %267 : vector<16x128xi1>, vector<16x128xf32>
    %c0_102 = arith.constant 0 : index
    %c0_103 = arith.constant 0 : index
    %269 = vector.load %arg9[%c0_102, %c0_103] : memref<16x128xf32, #tpu.memory_space<vmem>>, vector<16x128xf32>
    tpu.vector_store %arg9[%c0_102, %c0_103], %268 {strides = array<i32>} : memref<16x128xf32, #tpu.memory_space<vmem>>, vector<16x128xf32>,
    return
  }
}

module attributes {stable_mosaic.version = 11 : i64} {
  func.func @_qyx_head_kernel(%arg0: memref<2x1024xf32, #tpu.memory_space<vmem>>, %arg1: memref<1024x10xf32, #tpu.memory_space<vmem>>, %arg2: memref<1x10xf32, #tpu.memory_space<vmem>>, %arg3: memref<2x10xf32, #tpu.memory_space<vmem>>, %arg4: memref<2x10xf32, #tpu.memory_space<vmem>>, %arg5: memref<2x10xf32, #tpu.memory_space<vmem>>, %arg6: memref<2x10xf32, #tpu.memory_space<vmem>>) attributes {dimension_semantics = [], scalar_prefetch = 0 : i64, scratch_operands = 0 : i64, tpu.core_type = #tpu.core_type<tc>} {
    %c0 = arith.constant 0 : index
    %c0_0 = arith.constant 0 : index
    %0 = vector.load %arg0[%c0, %c0_0] : memref<2x1024xf32, #tpu.memory_space<vmem>>, vector<2x1024xf32>
    %c0_1 = arith.constant 0 : index
    %c0_2 = arith.constant 0 : index
    %1 = vector.load %arg1[%c0_1, %c0_2] : memref<1024x10xf32, #tpu.memory_space<vmem>>, vector<1024x10xf32>
    %cst = arith.constant dense<0.000000e+00> : vector<2x10xf32>
    %2 = tpu.matmul %0, %1, %cst {dimension_numbers = #tpu.dot_dimension_numbers<[1], [0], [0], [1], [0, 0, 1, 1], [], []>} : vector<2x1024xf32>, vector<1024x10xf32>, vector<2x10xf32> -> vector<2x10xf32>
    %c0_3 = arith.constant 0 : index
    %c0_4 = arith.constant 0 : index
    %3 = vector.load %arg2[%c0_3, %c0_4] : memref<1x10xf32, #tpu.memory_space<vmem>>, vector<1x10xf32>
    %4 = vector.broadcast %3 : vector<1x10xf32> to vector<2x10xf32>
    %5 = arith.addf %2, %4 : vector<2x10xf32>
    %c0_5 = arith.constant 0 : index
    %c0_6 = arith.constant 0 : index
    %6 = vector.load %arg4[%c0_5, %c0_6] : memref<2x10xf32, #tpu.memory_space<vmem>>, vector<2x10xf32>
    tpu.vector_store %arg4[%c0_5, %c0_6], %5 {strides = array<i32>} : memref<2x10xf32, #tpu.memory_space<vmem>>, vector<2x10xf32>,
    %cst_7 = arith.constant dense<0xFF800000> : vector<2xf32>
    %7 = vector.multi_reduction <maximumf>, %5, %cst_7 [1] : vector<2x10xf32> to vector<2xf32>
    %8 = vector.shape_cast %7 : vector<2xf32> to vector<2x1xf32>
    %9 = vector.broadcast %8 : vector<2x1xf32> to vector<2x10xf32>
    %10 = arith.subf %5, %9 : vector<2x10xf32>
    %11 = math.exp %10 : vector<2x10xf32>
    %cst_8 = arith.constant dense<0.000000e+00> : vector<2xf32>
    %12 = vector.multi_reduction <add>, %11, %cst_8 [1] : vector<2x10xf32> to vector<2xf32>
    %13 = vector.shape_cast %12 : vector<2xf32> to vector<2x1xf32>
    %14 = vector.broadcast %13 : vector<2x1xf32> to vector<2x10xf32>
    %15 = arith.divf %11, %14 : vector<2x10xf32>
    %c0_9 = arith.constant 0 : index
    %c0_10 = arith.constant 0 : index
    %16 = vector.load %arg6[%c0_9, %c0_10] : memref<2x10xf32, #tpu.memory_space<vmem>>, vector<2x10xf32>
    tpu.vector_store %arg6[%c0_9, %c0_10], %15 {strides = array<i32>} : memref<2x10xf32, #tpu.memory_space<vmem>>, vector<2x10xf32>,
    %c0_11 = arith.constant 0 : index
    %c0_12 = arith.constant 0 : index
    %17 = vector.load %arg3[%c0_11, %c0_12] : memref<2x10xf32, #tpu.memory_space<vmem>>, vector<2x10xf32>
    %18 = math.log %17 : vector<2x10xf32>
    %cst_13 = arith.constant 0.000000e+00 : f32
    %19 = vector.broadcast %cst_13 : f32 to vector<2x10xf32>
    %20 = arith.subf %19, %18 : vector<2x10xf32>
    %21 = math.log %20 : vector<2x10xf32>
    %cst_14 = arith.constant 0.000000e+00 : f32
    %22 = vector.broadcast %cst_14 : f32 to vector<2x10xf32>
    %23 = arith.subf %22, %21 : vector<2x10xf32>
    %24 = arith.addf %5, %23 : vector<2x10xf32>
    %cst_15 = arith.constant 2.000000e+00 : f32
    %25 = vector.broadcast %cst_15 : f32 to vector<2x10xf32>
    %26 = arith.mulf %24, %25 : vector<2x10xf32>
    %cst_16 = arith.constant dense<0xFF800000> : vector<2xf32>
    %27 = vector.multi_reduction <maximumf>, %26, %cst_16 [1] : vector<2x10xf32> to vector<2xf32>
    %28 = vector.shape_cast %27 : vector<2xf32> to vector<2x1xf32>
    %29 = vector.broadcast %28 : vector<2x1xf32> to vector<2x10xf32>
    %30 = arith.subf %26, %29 : vector<2x10xf32>
    %31 = math.exp %30 : vector<2x10xf32>
    %cst_17 = arith.constant dense<0.000000e+00> : vector<2xf32>
    %32 = vector.multi_reduction <add>, %31, %cst_17 [1] : vector<2x10xf32> to vector<2xf32>
    %33 = vector.shape_cast %32 : vector<2xf32> to vector<2x1xf32>
    %34 = vector.broadcast %33 : vector<2x1xf32> to vector<2x10xf32>
    %35 = arith.divf %31, %34 : vector<2x10xf32>
    %c0_18 = arith.constant 0 : index
    %c0_19 = arith.constant 0 : index
    %36 = vector.load %arg5[%c0_18, %c0_19] : memref<2x10xf32, #tpu.memory_space<vmem>>, vector<2x10xf32>
    tpu.vector_store %arg5[%c0_18, %c0_19], %35 {strides = array<i32>} : memref<2x10xf32, #tpu.memory_space<vmem>>, vector<2x10xf32>,
    return
  }
}

</mosaic_0001>

<llo_original>
// kernel: qy_x_forward.3
$region0: #{qy_x_forward.3}
  #allocation0 [shape = 'u32[]', space=smem, size = 0x4, offset = 0x4, fixed_abs, tag = 'smem constant byte address 0x4 - core index']
  #allocation1 [shape = 'u32[144,128]{1,0:T(1,128)}', space=vmem, size = 0x12000, scoped, tag = 'internal scratch']
  %s0 = inlined_call_operand.vmem [shape: f32[2,1024], index: 0, kind: input, shape index: {}]
  %s1 = inlined_call_operand.vmem [shape: f32[1024,10], index: 1, kind: input, shape index: {}]
  %s2 = inlined_call_operand.vmem [shape: f32[1,10], index: 2, kind: input, shape index: {}]
  %s3 = inlined_call_operand.vmem [shape: f32[2,10], index: 3, kind: input, shape index: {}]
  %s4 = inlined_call_operand.hbm [shape: f32[2,10], index: 4, kind: output, shape index: {0}]
  %s5 = inlined_call_operand.hbm [shape: f32[2,10], index: 5, kind: output, shape index: {1}]
  %s6 = inlined_call_operand.hbm [shape: f32[2,10], index: 6, kind: output, shape index: {2}]
  %7 = xla_tuple %s4, %s5, %s6
  %s8 = sld [smem:[#allocation0]]
  $region42: #{qy_x_forward.3} parent=0
    _
  %s10 = ssub.s32 1, %s8
  %s11 = scalar_select 0, %s10, %s8
  $region1: #{qy_x_forward.3} parent=0
    #allocation2 [shape = 'u8[1024]{0}', space=vmem, size = 0x400, scoped, tag = 'output window, operand 0, single buffered']
    #allocation3 [shape = 's32[1]{0}', space=sflag, size = 0x4, scoped, tag = 'scoped memory for qy_x_forward.3']
    #allocation4 [shape = 'u8[1024]{0}', space=vmem, size = 0x400, scoped, tag = 'output window, operand 1, single buffered']
    #allocation5 [shape = 's32[1]{0}', space=sflag, size = 0x4, scoped, tag = 'scoped memory for qy_x_forward.3']
    #allocation6 [shape = 'u8[1024]{0}', space=vmem, size = 0x400, scoped, tag = 'output window, operand 2, single buffered']
    %12 = vsyncpa [#allocation3], 0
    %13 = vsyncpa [#allocation5], 0
    // Predicated region
    $region2: #{qy_x_forward.3} parent=1 // pred_check
      _
    $region3: #{qy_x_forward.3} parent=1 // pred_check_branch
      %15 = sbr.rel (0) target = $region5
    $region4: #{qy_x_forward.3} parent=1 // pred_region
      _
    $region5: #{qy_x_forward.3} parent=1 // pred_fallthru
      _
    // Predicated region
    $region6: #{qy_x_forward.3} parent=1 // pred_check
      _
    $region7: #{qy_x_forward.3} parent=1 // pred_check_branch
      %17 = sbr.rel (0) target = $region9
    $region8: #{qy_x_forward.3} parent=1 // pred_region
      _
    $region9: #{qy_x_forward.3} parent=1 // pred_fallthru
      _
    // Predicated region
    $region10: #{qy_x_forward.3} parent=1 // pred_check
      _
    $region11: #{qy_x_forward.3} parent=1 // pred_check_branch
      %19 = sbr.rel (0) target = $region13
    $region12: #{qy_x_forward.3} parent=1 // pred_region
      _
    $region13: #{qy_x_forward.3} parent=1 // pred_fallthru
      _
    // Predicated region
    $region14: #{qy_x_forward.3} parent=1 // pred_check
      _
    $region15: #{qy_x_forward.3} parent=1 // pred_check_branch
      %21 = sbr.rel (0) target = $region17
    $region16: #{qy_x_forward.3} parent=1 // pred_region
      _
    $region17: #{qy_x_forward.3} parent=1 // pred_fallthru
      _
    %v22 = vld [vmem:[%s0] sm:$0xff]
    %v23 = vld [vmem:[%s0 + $0x8] sm:$0xff]
    %v24 = vld [vmem:[%s1] sm:$0xff]
    %v25 = vld [vmem:[%s1 + $0x8] sm:$0xff]
    %v26 = vld [vmem:[%s1 + $0x10] sm:$0xff]
    %v27 = vld [vmem:[%s1 + $0x18] sm:$0xff]
    %v28 = vld [vmem:[%s1 + $0x20] sm:$0xff]
    %v29 = vld [vmem:[%s1 + $0x28] sm:$0xff]
    %v30 = vld [vmem:[%s1 + $0x30] sm:$0xff]
    %v31 = vld [vmem:[%s1 + $0x38] sm:$0xff]
    %v32 = vld [vmem:[%s1 + $0x40] sm:$0xff]
    %v33 = vld [vmem:[%s1 + $0x48] sm:$0xff]
    %v34 = vld [vmem:[%s1 + $0x50] sm:$0xff]
    %v35 = vld [vmem:[%s1 + $0x58] sm:$0xff]
    %v36 = vld [vmem:[%s1 + $0x60] sm:$0xff]
    %v37 = vld [vmem:[%s1 + $0x68] sm:$0xff]
    %v38 = vld [vmem:[%s1 + $0x70] sm:$0xff]
    %v39 = vld [vmem:[%s1 + $0x78] sm:$0xff]
    %v40 = vld [vmem:[%s1 + $0x80] sm:$0xff]
    %v41 = vld [vmem:[%s1 + $0x88] sm:$0xff]
    %v42 = vld [vmem:[%s1 + $0x90] sm:$0xff]
    %v43 = vld [vmem:[%s1 + $0x98] sm:$0xff]
    %v44 = vld [vmem:[%s1 + $0xa0] sm:$0xff]
    %v45 = vld [vmem:[%s1 + $0xa8] sm:$0xff]
    %v46 = vld [vmem:[%s1 + $0xb0] sm:$0xff]
    %v47 = vld [vmem:[%s1 + $0xb8] sm:$0xff]
    %v48 = vld [vmem:[%s1 + $0xc0] sm:$0xff]
    %v49 = vld [vmem:[%s1 + $0xc8] sm:$0xff]
    %v50 = vld [vmem:[%s1 + $0xd0] sm:$0xff]
    %v51 = vld [vmem:[%s1 + $0xd8] sm:$0xff]
    %v52 = vld [vmem:[%s1 + $0xe0] sm:$0xff]
    %v53 = vld [vmem:[%s1 + $0xe8] sm:$0xff]
    %v54 = vld [vmem:[%s1 + $0xf0] sm:$0xff]
    %v55 = vld [vmem:[%s1 + $0xf8] sm:$0xff]
    %v56 = vld [vmem:[%s1 + $0x100] sm:$0xff]
    %v57 = vld [vmem:[%s1 + $0x108] sm:$0xff]
    %v58 = vld [vmem:[%s1 + $0x110] sm:$0xff]
    %v59 = vld [vmem:[%s1 + $0x118] sm:$0xff]
    %v60 = vld [vmem:[%s1 + $0x120] sm:$0xff]
    %v61 = vld [vmem:[%s1 + $0x128] sm:$0xff]
    %v62 = vld [vmem:[%s1 + $0x130] sm:$0xff]
    %v63 = vld [vmem:[%s1 + $0x138] sm:$0xff]
    %v64 = vld [vmem:[%s1 + $0x140] sm:$0xff]
    %v65 = vld [vmem:[%s1 + $0x148] sm:$0xff]
    %v66 = vld [vmem:[%s1 + $0x150] sm:$0xff]
    %v67 = vld [vmem:[%s1 + $0x158] sm:$0xff]
    %v68 = vld [vmem:[%s1 + $0x160] sm:$0xff]
    %v69 = vld [vmem:[%s1 + $0x168] sm:$0xff]
    %v70 = vld [vmem:[%s1 + $0x170] sm:$0xff]
    %v71 = vld [vmem:[%s1 + $0x178] sm:$0xff]
    %v72 = vld [vmem:[%s1 + $0x180] sm:$0xff]
    %v73 = vld [vmem:[%s1 + $0x188] sm:$0xff]
    %v74 = vld [vmem:[%s1 + $0x190] sm:$0xff]
    %v75 = vld [vmem:[%s1 + $0x198] sm:$0xff]
    %v76 = vld [vmem:[%s1 + $0x1a0] sm:$0xff]
    %v77 = vld [vmem:[%s1 + $0x1a8] sm:$0xff]
    %v78 = vld [vmem:[%s1 + $0x1b0] sm:$0xff]
    %v79 = vld [vmem:[%s1 + $0x1b8] sm:$0xff]
    %v80 = vld [vmem:[%s1 + $0x1c0] sm:$0xff]
    %v81 = vld [vmem:[%s1 + $0x1c8] sm:$0xff]
    %v82 = vld [vmem:[%s1 + $0x1d0] sm:$0xff]
    %v83 = vld [vmem:[%s1 + $0x1d8] sm:$0xff]
    %v84 = vld [vmem:[%s1 + $0x1e0] sm:$0xff]
    %v85 = vld [vmem:[%s1 + $0x1e8] sm:$0xff]
    %v86 = vld [vmem:[%s1 + $0x1f0] sm:$0xff]
    %v87 = vld [vmem:[%s1 + $0x1f8] sm:$0xff]
    %v88 = vld [vmem:[%s1 + $0x200] sm:$0xff]
    %v89 = vld [vmem:[%s1 + $0x208] sm:$0xff]
    %v90 = vld [vmem:[%s1 + $0x210] sm:$0xff]
    %v91 = vld [vmem:[%s1 + $0x218] sm:$0xff]
    %v92 = vld [vmem:[%s1 + $0x220] sm:$0xff]
    %v93 = vld [vmem:[%s1 + $0x228] sm:$0xff]
    %v94 = vld [vmem:[%s1 + $0x230] sm:$0xff]
    %v95 = vld [vmem:[%s1 + $0x238] sm:$0xff]
    %v96 = vld [vmem:[%s1 + $0x240] sm:$0xff]
    %v97 = vld [vmem:[%s1 + $0x248] sm:$0xff]
    %v98 = vld [vmem:[%s1 + $0x250] sm:$0xff]
    %v99 = vld [vmem:[%s1 + $0x258] sm:$0xff]
    %v100 = vld [vmem:[%s1 + $0x260] sm:$0xff]
    %v101 = vld [vmem:[%s1 + $0x268] sm:$0xff]
    %v102 = vld [vmem:[%s1 + $0x270] sm:$0xff]
    %v103 = vld [vmem:[%s1 + $0x278] sm:$0xff]
    %v104 = vld [vmem:[%s1 + $0x280] sm:$0xff]
    %v105 = vld [vmem:[%s1 + $0x288] sm:$0xff]
    %v106 = vld [vmem:[%s1 + $0x290] sm:$0xff]
    %v107 = vld [vmem:[%s1 + $0x298] sm:$0xff]
    %v108 = vld [vmem:[%s1 + $0x2a0] sm:$0xff]
    %v109 = vld [vmem:[%s1 + $0x2a8] sm:$0xff]
    %v110 = vld [vmem:[%s1 + $0x2b0] sm:$0xff]
    %v111 = vld [vmem:[%s1 + $0x2b8] sm:$0xff]
    %v112 = vld [vmem:[%s1 + $0x2c0] sm:$0xff]
    %v113 = vld [vmem:[%s1 + $0x2c8] sm:$0xff]
    %v114 = vld [vmem:[%s1 + $0x2d0] sm:$0xff]
    %v115 = vld [vmem:[%s1 + $0x2d8] sm:$0xff]
    %v116 = vld [vmem:[%s1 + $0x2e0] sm:$0xff]
    %v117 = vld [vmem:[%s1 + $0x2e8] sm:$0xff]
    %v118 = vld [vmem:[%s1 + $0x2f0] sm:$0xff]
    %v119 = vld [vmem:[%s1 + $0x2f8] sm:$0xff]
    %v120 = vld [vmem:[%s1 + $0x300] sm:$0xff]
    %v121 = vld [vmem:[%s1 + $0x308] sm:$0xff]
    %v122 = vld [vmem:[%s1 + $0x310] sm:$0xff]
    %v123 = vld [vmem:[%s1 + $0x318] sm:$0xff]
    %v124 = vld [vmem:[%s1 + $0x320] sm:$0xff]
    %v125 = vld [vmem:[%s1 + $0x328] sm:$0xff]
    %v126 = vld [vmem:[%s1 + $0x330] sm:$0xff]
    %v127 = vld [vmem:[%s1 + $0x338] sm:$0xff]
    %v128 = vld [vmem:[%s1 + $0x340] sm:$0xff]
    %v129 = vld [vmem:[%s1 + $0x348] sm:$0xff]
    %v130 = vld [vmem:[%s1 + $0x350] sm:$0xff]
    %v131 = vld [vmem:[%s1 + $0x358] sm:$0xff]
    %v132 = vld [vmem:[%s1 + $0x360] sm:$0xff]
    %v133 = vld [vmem:[%s1 + $0x368] sm:$0xff]
    %v134 = vld [vmem:[%s1 + $0x370] sm:$0xff]
    %v135 = vld [vmem:[%s1 + $0x378] sm:$0xff]
    %v136 = vld [vmem:[%s1 + $0x380] sm:$0xff]
    %v137 = vld [vmem:[%s1 + $0x388] sm:$0xff]
    %v138 = vld [vmem:[%s1 + $0x390] sm:$0xff]
    %v139 = vld [vmem:[%s1 + $0x398] sm:$0xff]
    %v140 = vld [vmem:[%s1 + $0x3a0] sm:$0xff]
    %v141 = vld [vmem:[%s1 + $0x3a8] sm:$0xff]
    %v142 = vld [vmem:[%s1 + $0x3b0] sm:$0xff]
    %v143 = vld [vmem:[%s1 + $0x3b8] sm:$0xff]
    %v144 = vld [vmem:[%s1 + $0x3c0] sm:$0xff]
    %v145 = vld [vmem:[%s1 + $0x3c8] sm:$0xff]
    %v146 = vld [vmem:[%s1 + $0x3d0] sm:$0xff]
    %v147 = vld [vmem:[%s1 + $0x3d8] sm:$0xff]
    %v148 = vld [vmem:[%s1 + $0x3e0] sm:$0xff]
    %v149 = vld [vmem:[%s1 + $0x3e8] sm:$0xff]
    %v150 = vld [vmem:[%s1 + $0x3f0] sm:$0xff]
    %v151 = vld [vmem:[%s1 + $0x3f8] sm:$0xff]
    %v152 = vld [vmem:[%s2] sm:$0x1]
    %v154 = vlaneseq
    %v155 = vshrl.u32 %v154, 7
    %v156 = vsub.s32 0, %v155
    %v157 = vrot.slane %v152, %v156
    %v161 = vcombine.high %v22, %v22
    %v163 = vunpack.c.l.s4 1983009808
    %v164 = vunpack.c.0.s8 %v163
    %v165 = vlaneseq
    %v166 = vshrl.u32 %v165, 7
    %v167 = vsub.s32 %v164, %v166
    %v168 = vrot.slane %v22, %v167
    %v170 = vunpack.c.l.s4 1983009808
    %v171 = vunpack.c.0.s8 %v170
    %v172 = vlaneseq
    %v173 = vshrl.u32 %v172, 7
    %v174 = vsub.s32 %v171, %v173
    %v175 = vrot.slane %v161, %v174
    %v176 = vcombine.high %v168, %v168
    %v177 = vcombine.high %v175, %v175
    %v178 = vcombine.high %v23, %v23
    %v180 = vunpack.c.l.s4 1983009808
    %v181 = vunpack.c.0.s8 %v180
    %v182 = vlaneseq
    %v183 = vshrl.u32 %v182, 7
    %v184 = vsub.s32 %v181, %v183
    %v185 = vrot.slane %v23, %v184
    %v187 = vunpack.c.l.s4 1983009808
    %v188 = vunpack.c.0.s8 %v187
    %v189 = vlaneseq
    %v190 = vshrl.u32 %v189, 7
    %v191 = vsub.s32 %v188, %v190
    %v192 = vrot.slane %v178, %v191
    %v193 = vcombine.high %v185, %v185
    %v194 = vcombine.high %v192, %v192
    %203 = vmatprep.subr.mxu0 0.0
    %204 = vmatpush1.msra.mxu0 %v39
    %205 = vmatprep.subr.mxu0 0.0
    %206 = vmatpush1.msra.mxu0 %v38
    %207 = vmatprep.subr.mxu0 0.0
    %208 = vmatpush1.msra.mxu0 %v37
    %209 = vmatprep.subr.mxu0 0.0
    %210 = vmatpush1.msra.mxu0 %v36
    %211 = vmatprep.subr.mxu0 0.0
    %212 = vmatpush1.msra.mxu0 %v35
    %213 = vmatprep.subr.mxu0 0.0
    %214 = vmatpush1.msra.mxu0 %v34
    %215 = vmatprep.subr.mxu0 0.0
    %216 = vmatpush1.msra.mxu0 %v33
    %217 = vmatprep.subr.mxu0 0.0
    %218 = vmatpush1.msra.mxu0 %v32
    %219 = vmatprep.subr.mxu0 0.0
    %220 = vmatpush1.msra.mxu0 %v31
    %221 = vmatprep.subr.mxu0 0.0
    %222 = vmatpush1.msra.mxu0 %v30
    %223 = vmatprep.subr.mxu0 0.0
    %224 = vmatpush1.msra.mxu0 %v29
    %225 = vmatprep.subr.mxu0 0.0
    %226 = vmatpush1.msra.mxu0 %v28
    %227 = vmatprep.subr.mxu0 0.0
    %228 = vmatpush1.msra.mxu0 %v27
    %229 = vmatprep.subr.mxu0 0.0
    %230 = vmatpush1.msra.mxu0 %v26
    %231 = vmatprep.subr.mxu0 0.0
    %232 = vmatpush1.msra.mxu0 %v25
    %233 = vmatprep.subr.mxu0 0.0
    %234 = vmatpush1.msra.mxu0 %v24
    %235 = vmatprep.subr.mxu0 0.0
    %236 = vmatpush2.msra.mxu0 %v55
    %237 = vmatprep.subr.mxu0 0.0
    %238 = vmatpush2.msra.mxu0 %v54
    %239 = vmatprep.subr.mxu0 0.0
    %240 = vmatpush2.msra.mxu0 %v53
    %241 = vmatprep.subr.mxu0 0.0
    %242 = vmatpush2.msra.mxu0 %v52
    %243 = vmatprep.subr.mxu0 0.0
    %244 = vmatpush2.msra.mxu0 %v51
    %245 = vmatprep.subr.mxu0 0.0
    %246 = vmatpush2.msra.mxu0 %v50
    %247 = vmatprep.subr.mxu0 0.0
    %248 = vmatpush2.msra.mxu0 %v49
    %249 = vmatprep.subr.mxu0 0.0
    %250 = vmatpush2.msra.mxu0 %v48
    %251 = vmatprep.subr.mxu0 0.0
    %252 = vmatpush2.msra.mxu0 %v47
    %253 = vmatprep.subr.mxu0 0.0
    %254 = vmatpush2.msra.mxu0 %v46
    %255 = vmatprep.subr.mxu0 0.0
    %256 = vmatpush2.msra.mxu0 %v45
    %257 = vmatprep.subr.mxu0 0.0
    %258 = vmatpush2.msra.mxu0 %v44
    %259 = vmatprep.subr.mxu0 0.0
    %260 = vmatpush2.msra.mxu0 %v43
    %261 = vmatprep.subr.mxu0 0.0
    %262 = vmatpush2.msra.mxu0 %v42
    %263 = vmatprep.subr.mxu0 0.0
    %264 = vmatpush2.msra.mxu0 %v41
    %265 = vmatprep.subr.mxu0 0.0
    %266 = vmatpush2.msra.mxu0 %v40
    %267 = vmatprep.mubr.f32.mxu0 %v176
    %268 = vmatmul.mubr.f32.gmra.mxu0 %v168
    %v269 = vpop.f32.mrf.mxu0
    %v270 = vadd.f32 %v157, %v269
    %v271 = vpop.f32.mrf.mxu0
    %272 = vdwg.mxu0
    %273 = vmatprep.subr.mxu0 0.0
    %274 = vmatpush1.msra.mxu0 %v71
    %275 = vmatprep.subr.mxu0 0.0
    %276 = vmatpush1.msra.mxu0 %v70
    %277 = vmatprep.subr.mxu0 0.0
    %278 = vmatpush1.msra.mxu0 %v69
    %279 = vmatprep.subr.mxu0 0.0
    %280 = vmatpush1.msra.mxu0 %v68
    %281 = vmatprep.subr.mxu0 0.0
    %282 = vmatpush1.msra.mxu0 %v67
    %283 = vmatprep.subr.mxu0 0.0
    %284 = vmatpush1.msra.mxu0 %v66
    %285 = vmatprep.subr.mxu0 0.0
    %286 = vmatpush1.msra.mxu0 %v65
    %287 = vmatprep.subr.mxu0 0.0
    %288 = vmatpush1.msra.mxu0 %v64
    %289 = vmatprep.subr.mxu0 0.0
    %290 = vmatpush1.msra.mxu0 %v63
    %291 = vmatprep.subr.mxu0 0.0
    %292 = vmatpush1.msra.mxu0 %v62
    %293 = vmatprep.subr.mxu0 0.0
    %294 = vmatpush1.msra.mxu0 %v61
    %295 = vmatprep.subr.mxu0 0.0
    %296 = vmatpush1.msra.mxu0 %v60
    %297 = vmatprep.subr.mxu0 0.0
    %298 = vmatpush1.msra.mxu0 %v59
    %299 = vmatprep.subr.mxu0 0.0
    %300 = vmatpush1.msra.mxu0 %v58
    %301 = vmatprep.subr.mxu0 0.0
    %302 = vmatpush1.msra.mxu0 %v57
    %303 = vmatprep.subr.mxu0 0.0
    %304 = vmatpush1.msra.mxu0 %v56
    %305 = vmatprep.subr.mxu0 0.0
    %306 = vmatpush2.msra.mxu0 %v87
    %307 = vmatprep.subr.mxu0 0.0
    %308 = vmatpush2.msra.mxu0 %v86
    %309 = vmatprep.subr.mxu0 0.0
    %310 = vmatpush2.msra.mxu0 %v85
    %311 = vmatprep.subr.mxu0 0.0
    %312 = vmatpush2.msra.mxu0 %v84
    %313 = vmatprep.subr.mxu0 0.0
    %314 = vmatpush2.msra.mxu0 %v83
    %315 = vmatprep.subr.mxu0 0.0
    %316 = vmatpush2.msra.mxu0 %v82
    %317 = vmatprep.subr.mxu0 0.0
    %318 = vmatpush2.msra.mxu0 %v81
    %319 = vmatprep.subr.mxu0 0.0
    %320 = vmatpush2.msra.mxu0 %v80
    %321 = vmatprep.subr.mxu0 0.0
    %322 = vmatpush2.msra.mxu0 %v79
    %323 = vmatprep.subr.mxu0 0.0
    %324 = vmatpush2.msra.mxu0 %v78
    %325 = vmatprep.subr.mxu0 0.0
    %326 = vmatpush2.msra.mxu0 %v77
    %327 = vmatprep.subr.mxu0 0.0
    %328 = vmatpush2.msra.mxu0 %v76
    %329 = vmatprep.subr.mxu0 0.0
    %330 = vmatpush2.msra.mxu0 %v75
    %331 = vmatprep.subr.mxu0 0.0
    %332 = vmatpush2.msra.mxu0 %v74
    %333 = vmatprep.subr.mxu0 0.0
    %334 = vmatpush2.msra.mxu0 %v73
    %335 = vmatprep.subr.mxu0 0.0
    %336 = vmatpush2.msra.mxu0 %v72
    %337 = vmatprep.mubr.f32.mxu0 %v177
    %338 = vmatmul.mubr.f32.gmra.mxu0 %v175
    %v339 = vpop.f32.mrf.mxu0
    %v340 = vadd.f32 %v270, %v339
    %v341 = vpop.f32.mrf.mxu0
    %342 = vdwg.mxu0
    %343 = vmatprep.subr.mxu0 0.0
    %344 = vmatpush1.msra.mxu0 %v103
    %345 = vmatprep.subr.mxu0 0.0
    %346 = vmatpush1.msra.mxu0 %v102
    %347 = vmatprep.subr.mxu0 0.0
    %348 = vmatpush1.msra.mxu0 %v101
    %349 = vmatprep.subr.mxu0 0.0
    %350 = vmatpush1.msra.mxu0 %v100
    %351 = vmatprep.subr.mxu0 0.0
    %352 = vmatpush1.msra.mxu0 %v99
    %353 = vmatprep.subr.mxu0 0.0
    %354 = vmatpush1.msra.mxu0 %v98
    %355 = vmatprep.subr.mxu0 0.0
    %356 = vmatpush1.msra.mxu0 %v97
    %357 = vmatprep.subr.mxu0 0.0
    %358 = vmatpush1.msra.mxu0 %v96
    %359 = vmatprep.subr.mxu0 0.0
    %360 = vmatpush1.msra.mxu0 %v95
    %361 = vmatprep.subr.mxu0 0.0
    %362 = vmatpush1.msra.mxu0 %v94
    %363 = vmatprep.subr.mxu0 0.0
    %364 = vmatpush1.msra.mxu0 %v93
    %365 = vmatprep.subr.mxu0 0.0
    %366 = vmatpush1.msra.mxu0 %v92
    %367 = vmatprep.subr.mxu0 0.0
    %368 = vmatpush1.msra.mxu0 %v91
    %369 = vmatprep.subr.mxu0 0.0
    %370 = vmatpush1.msra.mxu0 %v90
    %371 = vmatprep.subr.mxu0 0.0
    %372 = vmatpush1.msra.mxu0 %v89
    %373 = vmatprep.subr.mxu0 0.0
    %374 = vmatpush1.msra.mxu0 %v88
    %375 = vmatprep.subr.mxu0 0.0
    %376 = vmatpush2.msra.mxu0 %v119
    %377 = vmatprep.subr.mxu0 0.0
    %378 = vmatpush2.msra.mxu0 %v118
    %379 = vmatprep.subr.mxu0 0.0
    %380 = vmatpush2.msra.mxu0 %v117
    %381 = vmatprep.subr.mxu0 0.0
    %382 = vmatpush2.msra.mxu0 %v116
    %383 = vmatprep.subr.mxu0 0.0
    %384 = vmatpush2.msra.mxu0 %v115
    %385 = vmatprep.subr.mxu0 0.0
    %386 = vmatpush2.msra.mxu0 %v114
    %387 = vmatprep.subr.mxu0 0.0
    %388 = vmatpush2.msra.mxu0 %v113
    %389 = vmatprep.subr.mxu0 0.0
    %390 = vmatpush2.msra.mxu0 %v112
    %391 = vmatprep.subr.mxu0 0.0
    %392 = vmatpush2.msra.mxu0 %v111
    %393 = vmatprep.subr.mxu0 0.0
    %394 = vmatpush2.msra.mxu0 %v110
    %395 = vmatprep.subr.mxu0 0.0
    %396 = vmatpush2.msra.mxu0 %v109
    %397 = vmatprep.subr.mxu0 0.0
    %398 = vmatpush2.msra.mxu0 %v108
    %399 = vmatprep.subr.mxu0 0.0
    %400 = vmatpush2.msra.mxu0 %v107
    %401 = vmatprep.subr.mxu0 0.0
    %402 = vmatpush2.msra.mxu0 %v106
    %403 = vmatprep.subr.mxu0 0.0
    %404 = vmatpush2.msra.mxu0 %v105
    %405 = vmatprep.subr.mxu0 0.0
    %406 = vmatpush2.msra.mxu0 %v104
    %407 = vmatprep.mubr.f32.mxu0 %v193
    %408 = vmatmul.mubr.f32.gmra.mxu0 %v185
    %v409 = vpop.f32.mrf.mxu0
    %v410 = vadd.f32 %v340, %v409
    %v411 = vpop.f32.mrf.mxu0
    %412 = vdwg.mxu0
    %413 = vmatprep.subr.mxu0 0.0
    %414 = vmatpush1.msra.mxu0 %v135
    %415 = vmatprep.subr.mxu0 0.0
    %416 = vmatpush1.msra.mxu0 %v134
    %417 = vmatprep.subr.mxu0 0.0
    %418 = vmatpush1.msra.mxu0 %v133
    %419 = vmatprep.subr.mxu0 0.0
    %420 = vmatpush1.msra.mxu0 %v132
    %421 = vmatprep.subr.mxu0 0.0
    %422 = vmatpush1.msra.mxu0 %v131
    %423 = vmatprep.subr.mxu0 0.0
    %424 = vmatpush1.msra.mxu0 %v130
    %425 = vmatprep.subr.mxu0 0.0
    %426 = vmatpush1.msra.mxu0 %v129
    %427 = vmatprep.subr.mxu0 0.0
    %428 = vmatpush1.msra.mxu0 %v128
    %429 = vmatprep.subr.mxu0 0.0
    %430 = vmatpush1.msra.mxu0 %v127
    %431 = vmatprep.subr.mxu0 0.0
    %432 = vmatpush1.msra.mxu0 %v126
    %433 = vmatprep.subr.mxu0 0.0
    %434 = vmatpush1.msra.mxu0 %v125
    %435 = vmatprep.subr.mxu0 0.0
    %436 = vmatpush1.msra.mxu0 %v124
    %437 = vmatprep.subr.mxu0 0.0
    %438 = vmatpush1.msra.mxu0 %v123
    %439 = vmatprep.subr.mxu0 0.0
    %440 = vmatpush1.msra.mxu0 %v122
    %441 = vmatprep.subr.mxu0 0.0
    %442 = vmatpush1.msra.mxu0 %v121
    %443 = vmatprep.subr.mxu0 0.0
    %444 = vmatpush1.msra.mxu0 %v120
    %445 = vmatprep.subr.mxu0 0.0
    %446 = vmatpush2.msra.mxu0 %v151
    %447 = vmatprep.subr.mxu0 0.0
    %448 = vmatpush2.msra.mxu0 %v150
    %449 = vmatprep.subr.mxu0 0.0
    %450 = vmatpush2.msra.mxu0 %v149
    %451 = vmatprep.subr.mxu0 0.0
    %452 = vmatpush2.msra.mxu0 %v148
    %453 = vmatprep.subr.mxu0 0.0
    %454 = vmatpush2.msra.mxu0 %v147
    %455 = vmatprep.subr.mxu0 0.0
    %456 = vmatpush2.msra.mxu0 %v146
    %457 = vmatprep.subr.mxu0 0.0
    %458 = vmatpush2.msra.mxu0 %v145
    %459 = vmatprep.subr.mxu0 0.0
    %460 = vmatpush2.msra.mxu0 %v144
    %461 = vmatprep.subr.mxu0 0.0
    %462 = vmatpush2.msra.mxu0 %v143
    %463 = vmatprep.subr.mxu0 0.0
    %464 = vmatpush2.msra.mxu0 %v142
    %465 = vmatprep.subr.mxu0 0.0
    %466 = vmatpush2.msra.mxu0 %v141
    %467 = vmatprep.subr.mxu0 0.0
    %468 = vmatpush2.msra.mxu0 %v140
    %469 = vmatprep.subr.mxu0 0.0
    %470 = vmatpush2.msra.mxu0 %v139
    %471 = vmatprep.subr.mxu0 0.0
    %472 = vmatpush2.msra.mxu0 %v138
    %473 = vmatprep.subr.mxu0 0.0
    %474 = vmatpush2.msra.mxu0 %v137
    %475 = vmatprep.subr.mxu0 0.0
    %476 = vmatpush2.msra.mxu0 %v136
    %477 = vmatprep.mubr.f32.mxu0 %v194
    %478 = vmatmul.mubr.f32.gmra.mxu0 %v192
    %v479 = vpop.f32.mrf.mxu0
    %v480 = vadd.f32 %v410, %v479
    %v481 = vpop.f32.mrf.mxu0
    %482 = vdwg.mxu0
    %vm483 = vcmask 74752
    %484 = vst.msk [vmem:[#allocation2] sm:$0x3] %vm483, %v480
    %v485 = vsel %vm483, %v480, -inf
    %486 = vmax.xlane.f32.xlu0 %v485
    %v487 = vpop.xlane.xlu0 %486
    %v488 = vsub.f32 %v480, %v487
    %v489 = vmul.f32 %v488, 1.442695
    %v490 = vpow.pop %v489
    %v491 = vsel %vm483, %v490, 0.0
    %492 = vadd.xlane.f32.xlu0 %v491
    %v493 = vpop.xlane.xlu0 %492
    %v494 = vrcp.pop %v493
    %v495 = vmul.f32 %v490, %v494
    %496 = vst.msk [vmem:[#allocation6] sm:$0x3] %vm483, %v495
    %v497 = vld [vmem:[%s3] sm:$0x3]
    %v498 = vlog2.pop %v497
    %v499 = vmul.f32 %v498, 0.6931472
    %v500 = vsub.f32 0.0, %v499
    %v501 = vlog2.pop %v500
    %v502 = vmul.f32 %v501, 0.6931472
    %v503 = vsub.f32 0.0, %v502
    %v504 = vadd.f32 %v480, %v503
    %v505 = vmul.f32 %v504, 2.0
    %v506 = vsel %vm483, %v505, -inf
    %507 = vmax.xlane.f32.xlu0 %v506
    %v508 = vpop.xlane.xlu0 %507
    %v509 = vsub.f32 %v505, %v508
    %v510 = vmul.f32 %v509, 1.442695
    %v511 = vpow.pop %v510
    %v512 = vsel %vm483, %v511, 0.0
    %513 = vadd.xlane.f32.xlu0 %v512
    %v514 = vpop.xlane.xlu0 %513
    %v515 = vrcp.pop %v514
    %v516 = vmul.f32 %v511, %v515
    %517 = vst.msk [vmem:[#allocation4] sm:$0x3] %vm483, %v516
    // Predicated region
    $region18: #{qy_x_forward.3} parent=1 // pred_check
      _
    $region19: #{qy_x_forward.3} parent=1 // pred_check_branch
      %519 = sbr.rel (0) target = $region21
    $region20: #{qy_x_forward.3} parent=1 // pred_region
      %s521 = ssub.s32 32, 32
      %522 = vsyncadd [#allocation3], %s521
      %s524 = sshll.u32 [#allocation2], 4
      %s525 = int_to_ptr.vmem [resolvable:$true] %s524
      %527 = dma.vmem_to_hbm [thread:$0]  %s525, 32, %s4, [#allocation3]
    $region21: #{qy_x_forward.3} parent=1 // pred_fallthru
      _
    // Predicated region
    $region22: #{qy_x_forward.3} parent=1 // pred_check
      _
    $region23: #{qy_x_forward.3} parent=1 // pred_check_branch
      %529 = sbr.rel (0) target = $region25
    $region24: #{qy_x_forward.3} parent=1 // pred_region
      %s531 = ssub.s32 32, 32
      %532 = vsyncadd [#allocation5], %s531
      %s534 = sshll.u32 [#allocation4], 4
      %s535 = int_to_ptr.vmem [resolvable:$true] %s534
      %537 = dma.vmem_to_hbm [thread:$0]  %s535, 32, %s5, [#allocation5]
    $region25: #{qy_x_forward.3} parent=1 // pred_fallthru
      _
    // Predicated region
    $region26: #{qy_x_forward.3} parent=1 // pred_check
      _
    $region27: #{qy_x_forward.3} parent=1 // pred_check_branch
      %539 = sbr.rel (0) target = $region29
    $region28: #{qy_x_forward.3} parent=1 // pred_region
      %s541 = ssub.s32 32, 32
      %542 = vsyncadd [#allocation5], %s541
      %s544 = sshll.u32 [#allocation6], 4
      %s545 = int_to_ptr.vmem [resolvable:$true] %s544
      %547 = dma.vmem_to_hbm [thread:$0]  %s545, 32, %s6, [#allocation5]
    $region29: #{qy_x_forward.3} parent=1 // pred_fallthru
      _
    // Predicated region
    $region30: #{qy_x_forward.3} parent=1 // pred_check
      _
    $region31: #{qy_x_forward.3} parent=1 // pred_check_branch
      %549 = sbr.rel (0) target = $region33
    $region32: #{qy_x_forward.3} parent=1 // pred_region
      %550 = dma.done [#allocation3], 32
    $region33: #{qy_x_forward.3} parent=1 // pred_fallthru
      _
    // Predicated region
    $region34: #{qy_x_forward.3} parent=1 // pred_check
      _
    $region35: #{qy_x_forward.3} parent=1 // pred_check_branch
      %552 = sbr.rel (0) target = $region37
    $region36: #{qy_x_forward.3} parent=1 // pred_region
      %553 = dma.done [#allocation5], 32
    $region37: #{qy_x_forward.3} parent=1 // pred_fallthru
      _
    // Predicated region
    $region38: #{qy_x_forward.3} parent=1 // pred_check
      _
    $region39: #{qy_x_forward.3} parent=1 // pred_check_branch
      %555 = sbr.rel (0) target = $region41
    $region40: #{qy_x_forward.3} parent=1 // pred_region
      %556 = dma.done [#allocation5], 32
    $region41: #{qy_x_forward.3} parent=1 // pred_fallthru
      _
    %557 = vsyncpa [#allocation3], 1
    %558 = vsyncpa [#allocation5], 1

// kernel: qy_x_forward.2
$region0: #{qy_x_forward.2}
  #allocation0 [shape = 'u32[]', space=smem, size = 0x4, offset = 0x4, fixed_abs, tag = 'smem constant byte address 0x4 - core index']
  #allocation1 [shape = 'u32[144,128]{1,0:T(1,128)}', space=vmem, size = 0x12000, scoped, tag = 'internal scratch']
  %s0 = inlined_call_operand.vmem [shape: f32[16,64], index: 0, kind: input, shape index: {}]
  %s1 = inlined_call_operand.vmem [shape: f32[576,256], index: 1, kind: input, shape index: {}]
  %s2 = inlined_call_operand.vmem [shape: f32[1152,128], index: 2, kind: input, shape index: {}]
  %s3 = inlined_call_operand.vmem [shape: f32[1,128], index: 3, kind: input, shape index: {}]
  %s4 = inlined_call_operand.vmem [shape: f32[1,128], index: 4, kind: input, shape index: {}]
  %s5 = inlined_call_operand.vmem [shape: f32[1,128], index: 5, kind: input, shape index: {}]
  %s6 = inlined_call_operand.vmem [shape: f32[1,128], index: 6, kind: input, shape index: {}]
  %s7 = inlined_call_operand.vmem [shape: f32[1,128], index: 7, kind: input, shape index: {}]
  %s8 = inlined_call_operand.vmem [shape: f32[1,128], index: 8, kind: input, shape index: {}]
  %s9 = inlined_call_operand.vmem [shape: f32[16,128], index: 9, kind: output, shape index: {}]
  %s10 = sld [smem:[#allocation0]]
  $region46: #{qy_x_forward.2} parent=0
    _
  %s12 = ssub.s32 1, %s10
  %s13 = scalar_select 0, %s12, %s10
  // Predicated region
  $region2: #{qy_x_forward.2} parent=0 // pred_check
    _
  $region3: #{qy_x_forward.2} parent=0 // pred_check_branch
    %15 = sbr.rel (0) target = $region5
  $region4: #{qy_x_forward.2} parent=0 // pred_region
    _
  $region5: #{qy_x_forward.2} parent=0 // pred_fallthru
    _
  // Predicated region
  $region6: #{qy_x_forward.2} parent=0 // pred_check
    _
  $region7: #{qy_x_forward.2} parent=0 // pred_check_branch
    %17 = sbr.rel (0) target = $region9
  $region8: #{qy_x_forward.2} parent=0 // pred_region
    _
  $region9: #{qy_x_forward.2} parent=0 // pred_fallthru
    _
  // Predicated region
  $region10: #{qy_x_forward.2} parent=0 // pred_check
    _
  $region11: #{qy_x_forward.2} parent=0 // pred_check_branch
    %19 = sbr.rel (0) target = $region13
  $region12: #{qy_x_forward.2} parent=0 // pred_region
    _
  $region13: #{qy_x_forward.2} parent=0 // pred_fallthru
    _
  // Predicated region
  $region14: #{qy_x_forward.2} parent=0 // pred_check
    _
  $region15: #{qy_x_forward.2} parent=0 // pred_check_branch
    %21 = sbr.rel (0) target = $region17
  $region16: #{qy_x_forward.2} parent=0 // pred_region
    _
  $region17: #{qy_x_forward.2} parent=0 // pred_fallthru
    _
  // Predicated region
  $region18: #{qy_x_forward.2} parent=0 // pred_check
    _
  $region19: #{qy_x_forward.2} parent=0 // pred_check_branch
    %23 = sbr.rel (0) target = $region21
  $region20: #{qy_x_forward.2} parent=0 // pred_region
    _
  $region21: #{qy_x_forward.2} parent=0 // pred_fallthru
    _
  // Predicated region
  $region22: #{qy_x_forward.2} parent=0 // pred_check
    _
  $region23: #{qy_x_forward.2} parent=0 // pred_check_branch
    %25 = sbr.rel (0) target = $region25
  $region24: #{qy_x_forward.2} parent=0 // pred_region
    _
  $region25: #{qy_x_forward.2} parent=0 // pred_fallthru
    _
  // Predicated region
  $region26: #{qy_x_forward.2} parent=0 // pred_check
    _
  $region27: #{qy_x_forward.2} parent=0 // pred_check_branch
    %27 = sbr.rel (0) target = $region29
  $region28: #{qy_x_forward.2} parent=0 // pred_region
    _
  $region29: #{qy_x_forward.2} parent=0 // pred_fallthru
    _
  // Predicated region
  $region30: #{qy_x_forward.2} parent=0 // pred_check
    _
  $region31: #{qy_x_forward.2} parent=0 // pred_check_branch
    %29 = sbr.rel (0) target = $region33
  $region32: #{qy_x_forward.2} parent=0 // pred_region
    _
  $region33: #{qy_x_forward.2} parent=0 // pred_fallthru
    _
  // Predicated region
  $region34: #{qy_x_forward.2} parent=0 // pred_check
    _
  $region35: #{qy_x_forward.2} parent=0 // pred_check_branch
    %31 = sbr.rel (0) target = $region37
  $region36: #{qy_x_forward.2} parent=0 // pred_region
    _
  $region37: #{qy_x_forward.2} parent=0 // pred_fallthru
    _
  %v32 = vld [vmem:[%s0] sm:$0xff]
  %v33 = vld [vmem:[%s0 + $0x8] sm:$0xff]
  %vm36 = vcmask 1040384
  %v37 = vrot.slane %v32, 7
  %v38 = vrot.slane %v33, 7
  %v39 = vsel %vm36, %v37, %v38
  %v42 = vsel %vm36, 0.0, %v37
  %v43 = vlaneseq
  %v44 = vshrl.u32 %v43, 7
  %v45 = vadd.s32 %v44, 8
  %vm46 = vcmp.lt.s32.totalorder %v44, 0
  %v47 = vsub.s32 0, %v44
  %v48 = vsel %vm46, %v47, %v44
  %v49 = vshrl.u32 %v48, 3
  %v50 = vand.u32 %v48, 7
  %v51 = vsub.s32 0, %v50
  %v52 = vsel %vm46, %v51, %v50
  %vm53 = vcmp.lt.s32.totalorder %v45, 0
  %v54 = vsub.s32 0, %v45
  %v55 = vsel %vm53, %v54, %v45
  %v56 = vshrl.u32 %v55, 3
  %v57 = vand.u32 %v55, 7
  %v58 = vsub.s32 0, %v57
  %v59 = vsel %vm53, %v58, %v57
  %vm60 = vcmp.ne.s32.totalorder %v52, 0
  %vm61 = vcmp.ne.s32.totalorder %v59, 0
  %vm62 = vcmp.lt.s32.totalorder %v52, 0
  %vm63 = vcmp.lt.s32.totalorder %v59, 0
  %vm64 = vmand %vm62, %vm60
  %vm65 = vmand %vm63, %vm61
  %v66 = vadd.s32 %v52, 8
  %v67 = vadd.s32 %v59, 8
  %v68 = vsel %vm64, %v66, %v52
  %v69 = vsel %vm65, %v67, %v59
  %vm70 = vcmp.gt.s32.totalorder %v68, 0
  %vm71 = vcmp.gt.s32.totalorder %v69, 0
  %v72 = vsel %vm70, %v42, 0.0
  %v73 = vsel %vm71, %v39, 0.0
  %76 = vrot.lane.b32.xlu0 %v72, 4
  %v77 = vpop.permute.xlu0 %76
  %78 = vrot.lane.b32.xlu0 %v73, 4
  %v79 = vpop.permute.xlu0 %78
  %vm82 = vcmask 31744
  %v83 = vsel %vm82, 0.0, %v77
  %v84 = vsel %vm82, 0.0, %v79
  %85 = vrot.lane.b32.xlu0 %v72, 124
  %v86 = vpop.permute.xlu0 %85
  %87 = vrot.lane.b32.xlu0 %v73, 124
  %v88 = vpop.permute.xlu0 %87
  %vm91 = vcmask 490496
  %v92 = vsel %vm91, %v86, 0.0
  %v93 = vsel %vm91, %v88, 0.0
  %94 = vrot.lane.b32.xlu0 %v32, 4
  %v95 = vpop.permute.xlu0 %94
  %96 = vrot.lane.b32.xlu0 %v33, 4
  %v97 = vpop.permute.xlu0 %96
  %v100 = vsel %vm82, 0.0, %v95
  %v101 = vsel %vm82, 0.0, %v97
  %102 = vrot.lane.b32.xlu0 %v32, 124
  %v103 = vpop.permute.xlu0 %102
  %104 = vrot.lane.b32.xlu0 %v33, 124
  %v105 = vpop.permute.xlu0 %104
  %v108 = vsel %vm91, %v103, 0.0
  %v109 = vsel %vm91, %v105, 0.0
  %vm110 = vcmask 1046528
  %v111 = vrot.slane %v32, 1
  %v112 = vrot.slane %v33, 1
  %v113 = vsel %vm110, %v111, %v112
  %v116 = vsel %vm110, %v112, 0.0
  %vm117 = vcmp.lt.s32.totalorder %v68, 7
  %vm118 = vcmp.lt.s32.totalorder %v69, 7
  %v119 = vsel %vm117, %v113, 0.0
  %v120 = vsel %vm118, %v116, 0.0
  %123 = vrot.lane.b32.xlu0 %v119, 4
  %v124 = vpop.permute.xlu0 %123
  %125 = vrot.lane.b32.xlu0 %v120, 4
  %v126 = vpop.permute.xlu0 %125
  %v129 = vsel %vm82, 0.0, %v124
  %v130 = vsel %vm82, 0.0, %v126
  %131 = vrot.lane.b32.xlu0 %v119, 124
  %v132 = vpop.permute.xlu0 %131
  %133 = vrot.lane.b32.xlu0 %v120, 124
  %v134 = vpop.permute.xlu0 %133
  %v137 = vsel %vm91, %v132, 0.0
  %v138 = vsel %vm91, %v134, 0.0
  %139 = vrot.lane.b32.xlu0 %v72, 64
  %v140 = vpop.permute.xlu0 %139
  %141 = vrot.lane.b32.xlu0 %v73, 64
  %v142 = vpop.permute.xlu0 %141
  %147 = vrot.lane.b32.xlu0 %v100, 64
  %v148 = vpop.permute.xlu0 %147
  %149 = vrot.lane.b32.xlu0 %v101, 64
  %v150 = vpop.permute.xlu0 %149
  %155 = vrot.lane.b32.xlu0 %v108, 64
  %v156 = vpop.permute.xlu0 %155
  %157 = vrot.lane.b32.xlu0 %v109, 64
  %v158 = vpop.permute.xlu0 %157
  %161 = vrot.lane.b32.xlu0 %v119, 64
  %v162 = vpop.permute.xlu0 %161
  %163 = vrot.lane.b32.xlu0 %v120, 64
  %v164 = vpop.permute.xlu0 %163
  %vm167 = vcmask 523264
  %v168 = vsel %vm167, %v83, %v140
  %v169 = vsel %vm167, %v84, %v142
  %v170 = vsel %vm167, %v92, %v148
  %v171 = vsel %vm167, %v93, %v150
  %v172 = vsel %vm167, %v32, %v156
  %v173 = vsel %vm167, %v33, %v158
  %v174 = vsel %vm167, %v129, %v162
  %v175 = vsel %vm167, %v130, %v164
  %v176 = vld [vmem:[%s1] sm:$0xff]
  %v177 = vld [vmem:[%s1 + $0x8] sm:$0xff]
  %v178 = vld [vmem:[%s1 + $0x10] sm:$0xff]
  %v179 = vld [vmem:[%s1 + $0x18] sm:$0xff]
  %v180 = vld [vmem:[%s1 + $0x20] sm:$0xff]
  %v181 = vld [vmem:[%s1 + $0x28] sm:$0xff]
  %v182 = vld [vmem:[%s1 + $0x30] sm:$0xff]
  %v183 = vld [vmem:[%s1 + $0x38] sm:$0xff]
  %v184 = vld [vmem:[%s1 + $0x40] sm:$0xff]
  %v185 = vld [vmem:[%s1 + $0x48] sm:$0xff]
  %v186 = vld [vmem:[%s1 + $0x50] sm:$0xff]
  %v187 = vld [vmem:[%s1 + $0x58] sm:$0xff]
  %v188 = vld [vmem:[%s1 + $0x60] sm:$0xff]
  %v189 = vld [vmem:[%s1 + $0x68] sm:$0xff]
  %v190 = vld [vmem:[%s1 + $0x70] sm:$0xff]
  %v191 = vld [vmem:[%s1 + $0x78] sm:$0xff]
  %v192 = vld [vmem:[%s1 + $0x80] sm:$0xff]
  %v193 = vld [vmem:[%s1 + $0x88] sm:$0xff]
  %v194 = vld [vmem:[%s1 + $0x90] sm:$0xff]
  %v195 = vld [vmem:[%s1 + $0x98] sm:$0xff]
  %v196 = vld [vmem:[%s1 + $0xa0] sm:$0xff]
  %v197 = vld [vmem:[%s1 + $0xa8] sm:$0xff]
  %v198 = vld [vmem:[%s1 + $0xb0] sm:$0xff]
  %v199 = vld [vmem:[%s1 + $0xb8] sm:$0xff]
  %v200 = vld [vmem:[%s1 + $0xc0] sm:$0xff]
  %v201 = vld [vmem:[%s1 + $0xc8] sm:$0xff]
  %v202 = vld [vmem:[%s1 + $0xd0] sm:$0xff]
  %v203 = vld [vmem:[%s1 + $0xd8] sm:$0xff]
  %v204 = vld [vmem:[%s1 + $0xe0] sm:$0xff]
  %v205 = vld [vmem:[%s1 + $0xe8] sm:$0xff]
  %v206 = vld [vmem:[%s1 + $0xf0] sm:$0xff]
  %v207 = vld [vmem:[%s1 + $0xf8] sm:$0xff]
  %v208 = vld [vmem:[%s1 + $0x100] sm:$0xff]
  %v209 = vld [vmem:[%s1 + $0x108] sm:$0xff]
  %v210 = vld [vmem:[%s1 + $0x110] sm:$0xff]
  %v211 = vld [vmem:[%s1 + $0x118] sm:$0xff]
  %v212 = vld [vmem:[%s1 + $0x120] sm:$0xff]
  %v213 = vld [vmem:[%s1 + $0x128] sm:$0xff]
  %v214 = vld [vmem:[%s1 + $0x130] sm:$0xff]
  %v215 = vld [vmem:[%s1 + $0x138] sm:$0xff]
  %v216 = vld [vmem:[%s1 + $0x140] sm:$0xff]
  %v217 = vld [vmem:[%s1 + $0x148] sm:$0xff]
  %v218 = vld [vmem:[%s1 + $0x150] sm:$0xff]
  %v219 = vld [vmem:[%s1 + $0x158] sm:$0xff]
  %v220 = vld [vmem:[%s1 + $0x160] sm:$0xff]
  %v221 = vld [vmem:[%s1 + $0x168] sm:$0xff]
  %v222 = vld [vmem:[%s1 + $0x170] sm:$0xff]
  %v223 = vld [vmem:[%s1 + $0x178] sm:$0xff]
  %v224 = vld [vmem:[%s1 + $0x180] sm:$0xff]
  %v225 = vld [vmem:[%s1 + $0x188] sm:$0xff]
  %v226 = vld [vmem:[%s1 + $0x190] sm:$0xff]
  %v227 = vld [vmem:[%s1 + $0x198] sm:$0xff]
  %v228 = vld [vmem:[%s1 + $0x1a0] sm:$0xff]
  %v229 = vld [vmem:[%s1 + $0x1a8] sm:$0xff]
  %v230 = vld [vmem:[%s1 + $0x1b0] sm:$0xff]
  %v231 = vld [vmem:[%s1 + $0x1b8] sm:$0xff]
  %v232 = vld [vmem:[%s1 + $0x1c0] sm:$0xff]
  %v233 = vld [vmem:[%s1 + $0x1c8] sm:$0xff]
  %v234 = vld [vmem:[%s1 + $0x1d0] sm:$0xff]
  %v235 = vld [vmem:[%s1 + $0x1d8] sm:$0xff]
  %v236 = vld [vmem:[%s1 + $0x1e0] sm:$0xff]
  %v237 = vld [vmem:[%s1 + $0x1e8] sm:$0xff]
  %v238 = vld [vmem:[%s1 + $0x1f0] sm:$0xff]
  %v239 = vld [vmem:[%s1 + $0x1f8] sm:$0xff]
  %v240 = vld [vmem:[%s1 + $0x200] sm:$0xff]
  %v241 = vld [vmem:[%s1 + $0x208] sm:$0xff]
  %v242 = vld [vmem:[%s1 + $0x210] sm:$0xff]
  %v243 = vld [vmem:[%s1 + $0x218] sm:$0xff]
  %v244 = vld [vmem:[%s1 + $0x220] sm:$0xff]
  %v245 = vld [vmem:[%s1 + $0x228] sm:$0xff]
  %v246 = vld [vmem:[%s1 + $0x230] sm:$0xff]
  %v247 = vld [vmem:[%s1 + $0x238] sm:$0xff]
  %v248 = vld [vmem:[%s1 + $0x240] sm:$0xff]
  %v249 = vld [vmem:[%s1 + $0x248] sm:$0xff]
  %v250 = vld [vmem:[%s1 + $0x250] sm:$0xff]
  %v251 = vld [vmem:[%s1 + $0x258] sm:$0xff]
  %v252 = vld [vmem:[%s1 + $0x260] sm:$0xff]
  %v253 = vld [vmem:[%s1 + $0x268] sm:$0xff]
  %v254 = vld [vmem:[%s1 + $0x270] sm:$0xff]
  %v255 = vld [vmem:[%s1 + $0x278] sm:$0xff]
  %v256 = vld [vmem:[%s1 + $0x280] sm:$0xff]
  %v257 = vld [vmem:[%s1 + $0x288] sm:$0xff]
  %v258 = vld [vmem:[%s1 + $0x290] sm:$0xff]
  %v259 = vld [vmem:[%s1 + $0x298] sm:$0xff]
  %v260 = vld [vmem:[%s1 + $0x2a0] sm:$0xff]
  %v261 = vld [vmem:[%s1 + $0x2a8] sm:$0xff]
  %v262 = vld [vmem:[%s1 + $0x2b0] sm:$0xff]
  %v263 = vld [vmem:[%s1 + $0x2b8] sm:$0xff]
  %v264 = vld [vmem:[%s1 + $0x2c0] sm:$0xff]
  %v265 = vld [vmem:[%s1 + $0x2c8] sm:$0xff]
  %v266 = vld [vmem:[%s1 + $0x2d0] sm:$0xff]
  %v267 = vld [vmem:[%s1 + $0x2d8] sm:$0xff]
  %v268 = vld [vmem:[%s1 + $0x2e0] sm:$0xff]
  %v269 = vld [vmem:[%s1 + $0x2e8] sm:$0xff]
  %v270 = vld [vmem:[%s1 + $0x2f0] sm:$0xff]
  %v271 = vld [vmem:[%s1 + $0x2f8] sm:$0xff]
  %v272 = vld [vmem:[%s1 + $0x300] sm:$0xff]
  %v273 = vld [vmem:[%s1 + $0x308] sm:$0xff]
  %v274 = vld [vmem:[%s1 + $0x310] sm:$0xff]
  %v275 = vld [vmem:[%s1 + $0x318] sm:$0xff]
  %v276 = vld [vmem:[%s1 + $0x320] sm:$0xff]
  %v277 = vld [vmem:[%s1 + $0x328] sm:$0xff]
  %v278 = vld [vmem:[%s1 + $0x330] sm:$0xff]
  %v279 = vld [vmem:[%s1 + $0x338] sm:$0xff]
  %v280 = vld [vmem:[%s1 + $0x340] sm:$0xff]
  %v281 = vld [vmem:[%s1 + $0x348] sm:$0xff]
  %v282 = vld [vmem:[%s1 + $0x350] sm:$0xff]
  %v283 = vld [vmem:[%s1 + $0x358] sm:$0xff]
  %v284 = vld [vmem:[%s1 + $0x360] sm:$0xff]
  %v285 = vld [vmem:[%s1 + $0x368] sm:$0xff]
  %v286 = vld [vmem:[%s1 + $0x370] sm:$0xff]
  %v287 = vld [vmem:[%s1 + $0x378] sm:$0xff]
  %v288 = vld [vmem:[%s1 + $0x380] sm:$0xff]
  %v289 = vld [vmem:[%s1 + $0x388] sm:$0xff]
  %v290 = vld [vmem:[%s1 + $0x390] sm:$0xff]
  %v291 = vld [vmem:[%s1 + $0x398] sm:$0xff]
  %v292 = vld [vmem:[%s1 + $0x3a0] sm:$0xff]
  %v293 = vld [vmem:[%s1 + $0x3a8] sm:$0xff]
  %v294 = vld [vmem:[%s1 + $0x3b0] sm:$0xff]
  %v295 = vld [vmem:[%s1 + $0x3b8] sm:$0xff]
  %v296 = vld [vmem:[%s1 + $0x3c0] sm:$0xff]
  %v297 = vld [vmem:[%s1 + $0x3c8] sm:$0xff]
  %v298 = vld [vmem:[%s1 + $0x3d0] sm:$0xff]
  %v299 = vld [vmem:[%s1 + $0x3d8] sm:$0xff]
  %v300 = vld [vmem:[%s1 + $0x3e0] sm:$0xff]
  %v301 = vld [vmem:[%s1 + $0x3e8] sm:$0xff]
  %v302 = vld [vmem:[%s1 + $0x3f0] sm:$0xff]
  %v303 = vld [vmem:[%s1 + $0x3f8] sm:$0xff]
  %v304 = vld [vmem:[%s1 + $0x400] sm:$0xff]
  %v305 = vld [vmem:[%s1 + $0x408] sm:$0xff]
  %v306 = vld [vmem:[%s1 + $0x410] sm:$0xff]
  %v307 = vld [vmem:[%s1 + $0x418] sm:$0xff]
  %v308 = vld [vmem:[%s1 + $0x420] sm:$0xff]
  %v309 = vld [vmem:[%s1 + $0x428] sm:$0xff]
  %v310 = vld [vmem:[%s1 + $0x430] sm:$0xff]
  %v311 = vld [vmem:[%s1 + $0x438] sm:$0xff]
  %v312 = vld [vmem:[%s1 + $0x440] sm:$0xff]
  %v313 = vld [vmem:[%s1 + $0x448] sm:$0xff]
  %v314 = vld [vmem:[%s1 + $0x450] sm:$0xff]
  %v315 = vld [vmem:[%s1 + $0x458] sm:$0xff]
  %v316 = vld [vmem:[%s1 + $0x460] sm:$0xff]
  %v317 = vld [vmem:[%s1 + $0x468] sm:$0xff]
  %v318 = vld [vmem:[%s1 + $0x470] sm:$0xff]
  %v319 = vld [vmem:[%s1 + $0x478] sm:$0xff]
  %v321 = vsel %vm167, %v137, 0
  %v324 = vsel %vm167, %v138, 0
  %326 = vmatprep.subr.mxu0 %v207
  %327 = vmatpush1.msra.mxu0 %v206
  %328 = vmatprep.subr.mxu0 %v205
  %329 = vmatpush1.msra.mxu0 %v204
  %330 = vmatprep.subr.mxu0 %v203
  %331 = vmatpush1.msra.mxu0 %v202
  %332 = vmatprep.subr.mxu0 %v201
  %333 = vmatpush1.msra.mxu0 %v200
  %334 = vmatprep.subr.mxu0 %v199
  %335 = vmatpush1.msra.mxu0 %v198
  %336 = vmatprep.subr.mxu0 %v197
  %337 = vmatpush1.msra.mxu0 %v196
  %338 = vmatprep.subr.mxu0 %v195
  %339 = vmatpush1.msra.mxu0 %v194
  %340 = vmatprep.subr.mxu0 %v193
  %341 = vmatpush1.msra.mxu0 %v192
  %342 = vmatprep.subr.mxu0 %v191
  %343 = vmatpush1.msra.mxu0 %v190
  %344 = vmatprep.subr.mxu0 %v189
  %345 = vmatpush1.msra.mxu0 %v188
  %346 = vmatprep.subr.mxu0 %v187
  %347 = vmatpush1.msra.mxu0 %v186
  %348 = vmatprep.subr.mxu0 %v185
  %349 = vmatpush1.msra.mxu0 %v184
  %350 = vmatprep.subr.mxu0 %v183
  %351 = vmatpush1.msra.mxu0 %v182
  %352 = vmatprep.subr.mxu0 %v181
  %353 = vmatpush1.msra.mxu0 %v180
  %354 = vmatprep.subr.mxu0 %v179
  %355 = vmatpush1.msra.mxu0 %v178
  %356 = vmatprep.subr.mxu0 %v177
  %357 = vmatpush1.msra.mxu0 %v176
  %358 = vmatprep.subr.mxu0 %v239
  %359 = vmatpush2.msra.mxu0 %v238
  %360 = vmatprep.subr.mxu0 %v237
  %361 = vmatpush2.msra.mxu0 %v236
  %362 = vmatprep.subr.mxu0 %v235
  %363 = vmatpush2.msra.mxu0 %v234
  %364 = vmatprep.subr.mxu0 %v233
  %365 = vmatpush2.msra.mxu0 %v232
  %366 = vmatprep.subr.mxu0 %v231
  %367 = vmatpush2.msra.mxu0 %v230
  %368 = vmatprep.subr.mxu0 %v229
  %369 = vmatpush2.msra.mxu0 %v228
  %370 = vmatprep.subr.mxu0 %v227
  %371 = vmatpush2.msra.mxu0 %v226
  %372 = vmatprep.subr.mxu0 %v225
  %373 = vmatpush2.msra.mxu0 %v224
  %374 = vmatprep.subr.mxu0 %v223
  %375 = vmatpush2.msra.mxu0 %v222
  %376 = vmatprep.subr.mxu0 %v221
  %377 = vmatpush2.msra.mxu0 %v220
  %378 = vmatprep.subr.mxu0 %v219
  %379 = vmatpush2.msra.mxu0 %v218
  %380 = vmatprep.subr.mxu0 %v217
  %381 = vmatpush2.msra.mxu0 %v216
  %382 = vmatprep.subr.mxu0 %v215
  %383 = vmatpush2.msra.mxu0 %v214
  %384 = vmatprep.subr.mxu0 %v213
  %385 = vmatpush2.msra.mxu0 %v212
  %386 = vmatprep.subr.mxu0 %v211
  %387 = vmatpush2.msra.mxu0 %v210
  %388 = vmatprep.subr.mxu0 %v209
  %389 = vmatpush2.msra.mxu0 %v208
  %390 = vmatprep.mubr.f32.mxu0 %v170
  %391 = vmatmul.mubr.f32.gmra.mxu0 %v168
  %v392 = vpop.f32.mrf.mxu0
  %v393 = vadd.f32 0.0, %v392
  %v394 = vpop.f32.mrf.mxu0
  %v395 = vadd.f32 0.0, %v394
  %396 = vmatprep.mubr.f32.mxu0 %v171
  %397 = vmatmul.mubr.f32.gmra.mxu0 %v169
  %v398 = vpop.f32.mrf.mxu0
  %v399 = vadd.f32 0.0, %v398
  %v400 = vpop.f32.mrf.mxu0
  %v401 = vadd.f32 0.0, %v400
  %402 = vdwg.mxu0
  %403 = vmatprep.subr.mxu0 %v271
  %404 = vmatpush1.msra.mxu0 %v270
  %405 = vmatprep.subr.mxu0 %v269
  %406 = vmatpush1.msra.mxu0 %v268
  %407 = vmatprep.subr.mxu0 %v267
  %408 = vmatpush1.msra.mxu0 %v266
  %409 = vmatprep.subr.mxu0 %v265
  %410 = vmatpush1.msra.mxu0 %v264
  %411 = vmatprep.subr.mxu0 %v263
  %412 = vmatpush1.msra.mxu0 %v262
  %413 = vmatprep.subr.mxu0 %v261
  %414 = vmatpush1.msra.mxu0 %v260
  %415 = vmatprep.subr.mxu0 %v259
  %416 = vmatpush1.msra.mxu0 %v258
  %417 = vmatprep.subr.mxu0 %v257
  %418 = vmatpush1.msra.mxu0 %v256
  %419 = vmatprep.subr.mxu0 %v255
  %420 = vmatpush1.msra.mxu0 %v254
  %421 = vmatprep.subr.mxu0 %v253
  %422 = vmatpush1.msra.mxu0 %v252
  %423 = vmatprep.subr.mxu0 %v251
  %424 = vmatpush1.msra.mxu0 %v250
  %425 = vmatprep.subr.mxu0 %v249
  %426 = vmatpush1.msra.mxu0 %v248
  %427 = vmatprep.subr.mxu0 %v247
  %428 = vmatpush1.msra.mxu0 %v246
  %429 = vmatprep.subr.mxu0 %v245
  %430 = vmatpush1.msra.mxu0 %v244
  %431 = vmatprep.subr.mxu0 %v243
  %432 = vmatpush1.msra.mxu0 %v242
  %433 = vmatprep.subr.mxu0 %v241
  %434 = vmatpush1.msra.mxu0 %v240
  %435 = vmatprep.subr.mxu0 %v303
  %436 = vmatpush2.msra.mxu0 %v302
  %437 = vmatprep.subr.mxu0 %v301
  %438 = vmatpush2.msra.mxu0 %v300
  %439 = vmatprep.subr.mxu0 %v299
  %440 = vmatpush2.msra.mxu0 %v298
  %441 = vmatprep.subr.mxu0 %v297
  %442 = vmatpush2.msra.mxu0 %v296
  %443 = vmatprep.subr.mxu0 %v295
  %444 = vmatpush2.msra.mxu0 %v294
  %445 = vmatprep.subr.mxu0 %v293
  %446 = vmatpush2.msra.mxu0 %v292
  %447 = vmatprep.subr.mxu0 %v291
  %448 = vmatpush2.msra.mxu0 %v290
  %449 = vmatprep.subr.mxu0 %v289
  %450 = vmatpush2.msra.mxu0 %v288
  %451 = vmatprep.subr.mxu0 %v287
  %452 = vmatpush2.msra.mxu0 %v286
  %453 = vmatprep.subr.mxu0 %v285
  %454 = vmatpush2.msra.mxu0 %v284
  %455 = vmatprep.subr.mxu0 %v283
  %456 = vmatpush2.msra.mxu0 %v282
  %457 = vmatprep.subr.mxu0 %v281
  %458 = vmatpush2.msra.mxu0 %v280
  %459 = vmatprep.subr.mxu0 %v279
  %460 = vmatpush2.msra.mxu0 %v278
  %461 = vmatprep.subr.mxu0 %v277
  %462 = vmatpush2.msra.mxu0 %v276
  %463 = vmatprep.subr.mxu0 %v275
  %464 = vmatpush2.msra.mxu0 %v274
  %465 = vmatprep.subr.mxu0 %v273
  %466 = vmatpush2.msra.mxu0 %v272
  %467 = vmatprep.mubr.f32.mxu0 %v174
  %468 = vmatmul.mubr.f32.gmra.mxu0 %v172
  %v469 = vpop.f32.mrf.mxu0
  %v470 = vadd.f32 %v393, %v469
  %v471 = vpop.f32.mrf.mxu0
  %v472 = vadd.f32 %v395, %v471
  %473 = vmatprep.mubr.f32.mxu0 %v175
  %474 = vmatmul.mubr.f32.gmra.mxu0 %v173
  %v475 = vpop.f32.mrf.mxu0
  %v476 = vadd.f32 %v399, %v475
  %v477 = vpop.f32.mrf.mxu0
  %v478 = vadd.f32 %v401, %v477
  %479 = vdwg.mxu0
  %480 = vmatprep.subr.mxu0 0.0
  %481 = vmatpush1.msra.mxu0 0.0
  %482 = vmatprep.subr.mxu0 0.0
  %483 = vmatpush1.msra.mxu0 0.0
  %484 = vmatprep.subr.mxu0 0.0
  %485 = vmatpush1.msra.mxu0 0.0
  %486 = vmatprep.subr.mxu0 0.0
  %487 = vmatpush1.msra.mxu0 0.0
  %488 = vmatprep.subr.mxu0 0.0
  %489 = vmatpush1.msra.mxu0 0.0
  %490 = vmatprep.subr.mxu0 0.0
  %491 = vmatpush1.msra.mxu0 0.0
  %492 = vmatprep.subr.mxu0 0.0
  %493 = vmatpush1.msra.mxu0 0.0
  %494 = vmatprep.subr.mxu0 0.0
  %495 = vmatpush1.msra.mxu0 0.0
  %496 = vmatprep.subr.mxu0 %v319
  %497 = vmatpush1.msra.mxu0 %v318
  %498 = vmatprep.subr.mxu0 %v317
  %499 = vmatpush1.msra.mxu0 %v316
  %500 = vmatprep.subr.mxu0 %v315
  %501 = vmatpush1.msra.mxu0 %v314
  %502 = vmatprep.subr.mxu0 %v313
  %503 = vmatpush1.msra.mxu0 %v312
  %504 = vmatprep.subr.mxu0 %v311
  %505 = vmatpush1.msra.mxu0 %v310
  %506 = vmatprep.subr.mxu0 %v309
  %507 = vmatpush1.msra.mxu0 %v308
  %508 = vmatprep.subr.mxu0 %v307
  %509 = vmatpush1.msra.mxu0 %v306
  %510 = vmatprep.subr.mxu0 %v305
  %511 = vmatpush1.msra.mxu0 %v304
  %512 = vmatprep.subr.mxu0 0.0
  %513 = vmatpush2.msra.mxu0 0.0
  %514 = vmatprep.subr.mxu0 0.0
  %515 = vmatpush2.msra.mxu0 0.0
  %516 = vmatprep.subr.mxu0 0.0
  %517 = vmatpush2.msra.mxu0 0.0
  %518 = vmatprep.subr.mxu0 0.0
  %519 = vmatpush2.msra.mxu0 0.0
  %520 = vmatprep.subr.mxu0 0.0
  %521 = vmatpush2.msra.mxu0 0.0
  %522 = vmatprep.subr.mxu0 0.0
  %523 = vmatpush2.msra.mxu0 0.0
  %524 = vmatprep.subr.mxu0 0.0
  %525 = vmatpush2.msra.mxu0 0.0
  %526 = vmatprep.subr.mxu0 0.0
  %527 = vmatpush2.msra.mxu0 0.0
  %528 = vmatprep.subr.mxu0 0.0
  %529 = vmatpush2.msra.mxu0 0.0
  %530 = vmatprep.subr.mxu0 0.0
  %531 = vmatpush2.msra.mxu0 0.0
  %532 = vmatprep.subr.mxu0 0.0
  %533 = vmatpush2.msra.mxu0 0.0
  %534 = vmatprep.subr.mxu0 0.0
  %535 = vmatpush2.msra.mxu0 0.0
  %536 = vmatprep.subr.mxu0 0.0
  %537 = vmatpush2.msra.mxu0 0.0
  %538 = vmatprep.subr.mxu0 0.0
  %539 = vmatpush2.msra.mxu0 0.0
  %540 = vmatprep.subr.mxu0 0.0
  %541 = vmatpush2.msra.mxu0 0.0
  %542 = vmatprep.subr.mxu0 0.0
  %543 = vmatpush2.msra.mxu0 0.0
  %544 = vmatprep.mubr.f32.mxu0 0.0
  %545 = vmatmul.mubr.f32.gmra.mxu0 %v321
  %v546 = vpop.f32.mrf.mxu0
  %v547 = vadd.f32 %v470, %v546
  %v548 = vpop.f32.mrf.mxu0
  %v549 = vadd.f32 %v472, %v548
  %550 = vmatprep.mubr.f32.mxu0 0.0
  %551 = vmatmul.mubr.f32.gmra.mxu0 %v324
  %v552 = vpop.f32.mrf.mxu0
  %v553 = vadd.f32 %v476, %v552
  %v554 = vpop.f32.mrf.mxu0
  %v555 = vadd.f32 %v478, %v554
  %556 = vdwg.mxu0
  %v557 = vld [vmem:[%s3] sm:$0x1]
  %v558 = vld [vmem:[%s4] sm:$0x1]
  %559 = vrot.lane.b32.xlu0 %v547, 8
  %v560 = vpop.permute.xlu0 %559
  %561 = vrot.lane.b32.xlu0 %v553, 8
  %v562 = vpop.permute.xlu0 %561
  %v563 = vadd.f32 %v547, %v560
  %v564 = vadd.f32 %v553, %v562
  %565 = vrot.lane.b32.xlu0 %v563, 16
  %v566 = vpop.permute.xlu0 %565
  %567 = vrot.lane.b32.xlu0 %v564, 16
  %v568 = vpop.permute.xlu0 %567
  %v569 = vadd.f32 %v563, %v566
  %v570 = vadd.f32 %v564, %v568
  %571 = vrot.lane.b32.xlu0 %v569, 32
  %v572 = vpop.permute.xlu0 %571
  %573 = vrot.lane.b32.xlu0 %v570, 32
  %v574 = vpop.permute.xlu0 %573
  %v575 = vadd.f32 %v569, %v572
  %v576 = vadd.f32 %v570, %v574
  %577 = vrot.lane.b32.xlu0 %v575, 64
  %v578 = vpop.permute.xlu0 %577
  %579 = vrot.lane.b32.xlu0 %v576, 64
  %v580 = vpop.permute.xlu0 %579
  %v581 = vadd.f32 %v575, %v578
  %v582 = vadd.f32 %v576, %v580
  %v583 = vadd.f32 %v581, %v582
  %v584 = vrot.slane %v583, 4
  %v585 = vadd.f32 %v583, %v584
  %v586 = vrot.slane %v585, 2
  %v587 = vadd.f32 %v585, %v586
  %v588 = vrot.slane %v587, 1
  %v589 = vadd.f32 %v587, %v588
  %v590 = vmul.f32 %v547, %v547
  %v591 = vmul.f32 %v553, %v553
  %592 = vrot.lane.b32.xlu0 %v590, 8
  %v593 = vpop.permute.xlu0 %592
  %594 = vrot.lane.b32.xlu0 %v591, 8
  %v595 = vpop.permute.xlu0 %594
  %v596 = vadd.f32 %v590, %v593
  %v597 = vadd.f32 %v591, %v595
  %598 = vrot.lane.b32.xlu0 %v596, 16
  %v599 = vpop.permute.xlu0 %598
  %600 = vrot.lane.b32.xlu0 %v597, 16
  %v601 = vpop.permute.xlu0 %600
  %v602 = vadd.f32 %v596, %v599
  %v603 = vadd.f32 %v597, %v601
  %604 = vrot.lane.b32.xlu0 %v602, 32
  %v605 = vpop.permute.xlu0 %604
  %606 = vrot.lane.b32.xlu0 %v603, 32
  %v607 = vpop.permute.xlu0 %606
  %v608 = vadd.f32 %v602, %v605
  %v609 = vadd.f32 %v603, %v607
  %610 = vrot.lane.b32.xlu0 %v608, 64
  %v611 = vpop.permute.xlu0 %610
  %612 = vrot.lane.b32.xlu0 %v609, 64
  %v613 = vpop.permute.xlu0 %612
  %v614 = vadd.f32 %v608, %v611
  %v615 = vadd.f32 %v609, %v613
  %v616 = vadd.f32 %v614, %v615
  %v617 = vrot.slane %v616, 4
  %v618 = vadd.f32 %v616, %v617
  %v619 = vrot.slane %v618, 2
  %v620 = vadd.f32 %v618, %v619
  %v621 = vrot.slane %v620, 1
  %v622 = vadd.f32 %v620, %v621
  %v623 = vmul.f32 %v589, 0.00390625
  %v624 = vmul.f32 %v622, 0.00390625
  %v625 = vmul.f32 %v623, %v623
  %v626 = vsub.f32 %v624, %v625
  %v627 = vadd.f32 %v626, 1e-05
  %v628 = vrsqrt.pop %v627
  %v629 = vmul.f32 %v628, %v557
  %v630 = vsub.f32 %v547, %v623
  %v631 = vsub.f32 %v553, %v623
  %v632 = vlaneseq
  %v633 = vshrl.u32 %v632, 7
  %v634 = vsub.s32 0, %v633
  %v635 = vrot.slane %v629, %v634
  %v636 = vmul.f32 %v630, %v635
  %v637 = vmul.f32 %v631, %v635
  %v639 = vlaneseq
  %v640 = vshrl.u32 %v639, 7
  %v641 = vsub.s32 0, %v640
  %v642 = vrot.slane %v558, %v641
  %v644 = vadd.f32 %v636, %v642
  %v645 = vadd.f32 %v637, %v642
  %vm646 = vcmp.gt.f32.partialorder %v644, 0.0
  %vm647 = vcmp.gt.f32.partialorder %v645, 0.0
  %v648 = vmul.f32 %v644, 0.2
  %v649 = vmul.f32 %v645, 0.2
  %v650 = vsel %vm646, %v644, %v648
  %v651 = vsel %vm647, %v645, %v649
  %v652 = vld [vmem:[%s7] sm:$0x1]
  %v653 = vld [vmem:[%s8] sm:$0x1]
  %654 = vrot.lane.b32.xlu0 %v549, 8
  %v655 = vpop.permute.xlu0 %654
  %656 = vrot.lane.b32.xlu0 %v555, 8
  %v657 = vpop.permute.xlu0 %656
  %v658 = vadd.f32 %v549, %v655
  %v659 = vadd.f32 %v555, %v657
  %660 = vrot.lane.b32.xlu0 %v658, 16
  %v661 = vpop.permute.xlu0 %660
  %662 = vrot.lane.b32.xlu0 %v659, 16
  %v663 = vpop.permute.xlu0 %662
  %v664 = vadd.f32 %v658, %v661
  %v665 = vadd.f32 %v659, %v663
  %666 = vrot.lane.b32.xlu0 %v664, 32
  %v667 = vpop.permute.xlu0 %666
  %668 = vrot.lane.b32.xlu0 %v665, 32
  %v669 = vpop.permute.xlu0 %668
  %v670 = vadd.f32 %v664, %v667
  %v671 = vadd.f32 %v665, %v669
  %672 = vrot.lane.b32.xlu0 %v670, 64
  %v673 = vpop.permute.xlu0 %672
  %674 = vrot.lane.b32.xlu0 %v671, 64
  %v675 = vpop.permute.xlu0 %674
  %v676 = vadd.f32 %v670, %v673
  %v677 = vadd.f32 %v671, %v675
  %v678 = vadd.f32 %v676, %v677
  %v679 = vrot.slane %v678, 4
  %v680 = vadd.f32 %v678, %v679
  %v681 = vrot.slane %v680, 2
  %v682 = vadd.f32 %v680, %v681
  %v683 = vrot.slane %v682, 1
  %v684 = vadd.f32 %v682, %v683
  %v685 = vmul.f32 %v549, %v549
  %v686 = vmul.f32 %v555, %v555
  %687 = vrot.lane.b32.xlu0 %v685, 8
  %v688 = vpop.permute.xlu0 %687
  %689 = vrot.lane.b32.xlu0 %v686, 8
  %v690 = vpop.permute.xlu0 %689
  %v691 = vadd.f32 %v685, %v688
  %v692 = vadd.f32 %v686, %v690
  %693 = vrot.lane.b32.xlu0 %v691, 16
  %v694 = vpop.permute.xlu0 %693
  %695 = vrot.lane.b32.xlu0 %v692, 16
  %v696 = vpop.permute.xlu0 %695
  %v697 = vadd.f32 %v691, %v694
  %v698 = vadd.f32 %v692, %v696
  %699 = vrot.lane.b32.xlu0 %v697, 32
  %v700 = vpop.permute.xlu0 %699
  %701 = vrot.lane.b32.xlu0 %v698, 32
  %v702 = vpop.permute.xlu0 %701
  %v703 = vadd.f32 %v697, %v700
  %v704 = vadd.f32 %v698, %v702
  %705 = vrot.lane.b32.xlu0 %v703, 64
  %v706 = vpop.permute.xlu0 %705
  %707 = vrot.lane.b32.xlu0 %v704, 64
  %v708 = vpop.permute.xlu0 %707
  %v709 = vadd.f32 %v703, %v706
  %v710 = vadd.f32 %v704, %v708
  %v711 = vadd.f32 %v709, %v710
  %v712 = vrot.slane %v711, 4
  %v713 = vadd.f32 %v711, %v712
  %v714 = vrot.slane %v713, 2
  %v715 = vadd.f32 %v713, %v714
  %v716 = vrot.slane %v715, 1
  %v717 = vadd.f32 %v715, %v716
  %v718 = vmul.f32 %v684, 0.00390625
  %v719 = vmul.f32 %v717, 0.00390625
  %v720 = vmul.f32 %v718, %v718
  %v721 = vsub.f32 %v719, %v720
  %v722 = vadd.f32 %v721, 1e-05
  %v723 = vrsqrt.pop %v722
  %v724 = vmul.f32 %v723, %v652
  %v725 = vsub.f32 %v549, %v718
  %v726 = vsub.f32 %v555, %v718
  %v727 = vlaneseq
  %v728 = vshrl.u32 %v727, 7
  %v729 = vsub.s32 0, %v728
  %v730 = vrot.slane %v724, %v729
  %v731 = vmul.f32 %v725, %v730
  %v732 = vmul.f32 %v726, %v730
  %v734 = vlaneseq
  %v735 = vshrl.u32 %v734, 7
  %v736 = vsub.s32 0, %v735
  %v737 = vrot.slane %v653, %v736
  %v739 = vadd.f32 %v731, %v737
  %v740 = vadd.f32 %v732, %v737
  %v743 = vrot.slane %v650, 7
  %v744 = vrot.slane %v651, 7
  %v745 = vsel %vm36, %v743, %v744
  %v748 = vsel %vm36, 0.0, %v743
  %v749 = vsel %vm70, %v748, 0.0
  %v750 = vsel %vm71, %v745, 0.0
  %753 = vrot.lane.b32.xlu0 %v749, 8
  %v754 = vpop.permute.xlu0 %753
  %755 = vrot.lane.b32.xlu0 %v750, 8
  %v756 = vpop.permute.xlu0 %755
  %vm759 = vcmask 64512
  %v760 = vsel %vm759, 0.0, %v754
  %v761 = vsel %vm759, 0.0, %v756
  %762 = vrot.lane.b32.xlu0 %v749, 120
  %v763 = vpop.permute.xlu0 %762
  %764 = vrot.lane.b32.xlu0 %v750, 120
  %v765 = vpop.permute.xlu0 %764
  %vm768 = vcmask 982016
  %v769 = vsel %vm768, %v763, 0.0
  %v770 = vsel %vm768, %v765, 0.0
  %771 = vrot.lane.b32.xlu0 %v650, 8
  %v772 = vpop.permute.xlu0 %771
  %773 = vrot.lane.b32.xlu0 %v651, 8
  %v774 = vpop.permute.xlu0 %773
  %v777 = vsel %vm759, 0.0, %v772
  %v778 = vsel %vm759, 0.0, %v774
  %779 = vrot.lane.b32.xlu0 %v650, 120
  %v780 = vpop.permute.xlu0 %779
  %781 = vrot.lane.b32.xlu0 %v651, 120
  %v782 = vpop.permute.xlu0 %781
  %v785 = vsel %vm768, %v780, 0.0
  %v786 = vsel %vm768, %v782, 0.0
  %v787 = vrot.slane %v650, 1
  %v788 = vrot.slane %v651, 1
  %v789 = vsel %vm110, %v787, %v788
  %v792 = vsel %vm110, %v788, 0.0
  %v793 = vsel %vm117, %v789, 0.0
  %v794 = vsel %vm118, %v792, 0.0
  %797 = vrot.lane.b32.xlu0 %v793, 8
  %v798 = vpop.permute.xlu0 %797
  %799 = vrot.lane.b32.xlu0 %v794, 8
  %v800 = vpop.permute.xlu0 %799
  %v803 = vsel %vm759, 0.0, %v798
  %v804 = vsel %vm759, 0.0, %v800
  %805 = vrot.lane.b32.xlu0 %v793, 120
  %v806 = vpop.permute.xlu0 %805
  %807 = vrot.lane.b32.xlu0 %v794, 120
  %v808 = vpop.permute.xlu0 %807
  %v811 = vsel %vm768, %v806, 0.0
  %v812 = vsel %vm768, %v808, 0.0
  %v813 = vld [vmem:[%s2] sm:$0xff]
  %v814 = vld [vmem:[%s2 + $0x8] sm:$0xff]
  %v815 = vld [vmem:[%s2 + $0x10] sm:$0xff]
  %v816 = vld [vmem:[%s2 + $0x18] sm:$0xff]
  %v817 = vld [vmem:[%s2 + $0x20] sm:$0xff]
  %v818 = vld [vmem:[%s2 + $0x28] sm:$0xff]
  %v819 = vld [vmem:[%s2 + $0x30] sm:$0xff]
  %v820 = vld [vmem:[%s2 + $0x38] sm:$0xff]
  %v821 = vld [vmem:[%s2 + $0x40] sm:$0xff]
  %v822 = vld [vmem:[%s2 + $0x48] sm:$0xff]
  %v823 = vld [vmem:[%s2 + $0x50] sm:$0xff]
  %v824 = vld [vmem:[%s2 + $0x58] sm:$0xff]
  %v825 = vld [vmem:[%s2 + $0x60] sm:$0xff]
  %v826 = vld [vmem:[%s2 + $0x68] sm:$0xff]
  %v827 = vld [vmem:[%s2 + $0x70] sm:$0xff]
  %v828 = vld [vmem:[%s2 + $0x78] sm:$0xff]
  %v829 = vld [vmem:[%s2 + $0x80] sm:$0xff]
  %v830 = vld [vmem:[%s2 + $0x88] sm:$0xff]
  %v831 = vld [vmem:[%s2 + $0x90] sm:$0xff]
  %v832 = vld [vmem:[%s2 + $0x98] sm:$0xff]
  %v833 = vld [vmem:[%s2 + $0xa0] sm:$0xff]
  %v834 = vld [vmem:[%s2 + $0xa8] sm:$0xff]
  %v835 = vld [vmem:[%s2 + $0xb0] sm:$0xff]
  %v836 = vld [vmem:[%s2 + $0xb8] sm:$0xff]
  %v837 = vld [vmem:[%s2 + $0xc0] sm:$0xff]
  %v838 = vld [vmem:[%s2 + $0xc8] sm:$0xff]
  %v839 = vld [vmem:[%s2 + $0xd0] sm:$0xff]
  %v840 = vld [vmem:[%s2 + $0xd8] sm:$0xff]
  %v841 = vld [vmem:[%s2 + $0xe0] sm:$0xff]
  %v842 = vld [vmem:[%s2 + $0xe8] sm:$0xff]
  %v843 = vld [vmem:[%s2 + $0xf0] sm:$0xff]
  %v844 = vld [vmem:[%s2 + $0xf8] sm:$0xff]
  %v845 = vld [vmem:[%s2 + $0x100] sm:$0xff]
  %v846 = vld [vmem:[%s2 + $0x108] sm:$0xff]
  %v847 = vld [vmem:[%s2 + $0x110] sm:$0xff]
  %v848 = vld [vmem:[%s2 + $0x118] sm:$0xff]
  %v849 = vld [vmem:[%s2 + $0x120] sm:$0xff]
  %v850 = vld [vmem:[%s2 + $0x128] sm:$0xff]
  %v851 = vld [vmem:[%s2 + $0x130] sm:$0xff]
  %v852 = vld [vmem:[%s2 + $0x138] sm:$0xff]
  %v853 = vld [vmem:[%s2 + $0x140] sm:$0xff]
  %v854 = vld [vmem:[%s2 + $0x148] sm:$0xff]
  %v855 = vld [vmem:[%s2 + $0x150] sm:$0xff]
  %v856 = vld [vmem:[%s2 + $0x158] sm:$0xff]
  %v857 = vld [vmem:[%s2 + $0x160] sm:$0xff]
  %v858 = vld [vmem:[%s2 + $0x168] sm:$0xff]
  %v859 = vld [vmem:[%s2 + $0x170] sm:$0xff]
  %v860 = vld [vmem:[%s2 + $0x178] sm:$0xff]
  %v861 = vld [vmem:[%s2 + $0x180] sm:$0xff]
  %v862 = vld [vmem:[%s2 + $0x188] sm:$0xff]
  %v863 = vld [vmem:[%s2 + $0x190] sm:$0xff]
  %v864 = vld [vmem:[%s2 + $0x198] sm:$0xff]
  %v865 = vld [vmem:[%s2 + $0x1a0] sm:$0xff]
  %v866 = vld [vmem:[%s2 + $0x1a8] sm:$0xff]
  %v867 = vld [vmem:[%s2 + $0x1b0] sm:$0xff]
  %v868 = vld [vmem:[%s2 + $0x1b8] sm:$0xff]
  %v869 = vld [vmem:[%s2 + $0x1c0] sm:$0xff]
  %v870 = vld [vmem:[%s2 + $0x1c8] sm:$0xff]
  %v871 = vld [vmem:[%s2 + $0x1d0] sm:$0xff]
  %v872 = vld [vmem:[%s2 + $0x1d8] sm:$0xff]
  %v873 = vld [vmem:[%s2 + $0x1e0] sm:$0xff]
  %v874 = vld [vmem:[%s2 + $0x1e8] sm:$0xff]
  %v875 = vld [vmem:[%s2 + $0x1f0] sm:$0xff]
  %v876 = vld [vmem:[%s2 + $0x1f8] sm:$0xff]
  %v877 = vld [vmem:[%s2 + $0x200] sm:$0xff]
  %v878 = vld [vmem:[%s2 + $0x208] sm:$0xff]
  %v879 = vld [vmem:[%s2 + $0x210] sm:$0xff]
  %v880 = vld [vmem:[%s2 + $0x218] sm:$0xff]
  %v881 = vld [vmem:[%s2 + $0x220] sm:$0xff]
  %v882 = vld [vmem:[%s2 + $0x228] sm:$0xff]
  %v883 = vld [vmem:[%s2 + $0x230] sm:$0xff]
  %v884 = vld [vmem:[%s2 + $0x238] sm:$0xff]
  %v885 = vld [vmem:[%s2 + $0x240] sm:$0xff]
  %v886 = vld [vmem:[%s2 + $0x248] sm:$0xff]
  %v887 = vld [vmem:[%s2 + $0x250] sm:$0xff]
  %v888 = vld [vmem:[%s2 + $0x258] sm:$0xff]
  %v889 = vld [vmem:[%s2 + $0x260] sm:$0xff]
  %v890 = vld [vmem:[%s2 + $0x268] sm:$0xff]
  %v891 = vld [vmem:[%s2 + $0x270] sm:$0xff]
  %v892 = vld [vmem:[%s2 + $0x278] sm:$0xff]
  %v893 = vld [vmem:[%s2 + $0x280] sm:$0xff]
  %v894 = vld [vmem:[%s2 + $0x288] sm:$0xff]
  %v895 = vld [vmem:[%s2 + $0x290] sm:$0xff]
  %v896 = vld [vmem:[%s2 + $0x298] sm:$0xff]
  %v897 = vld [vmem:[%s2 + $0x2a0] sm:$0xff]
  %v898 = vld [vmem:[%s2 + $0x2a8] sm:$0xff]
  %v899 = vld [vmem:[%s2 + $0x2b0] sm:$0xff]
  %v900 = vld [vmem:[%s2 + $0x2b8] sm:$0xff]
  %v901 = vld [vmem:[%s2 + $0x2c0] sm:$0xff]
  %v902 = vld [vmem:[%s2 + $0x2c8] sm:$0xff]
  %v903 = vld [vmem:[%s2 + $0x2d0] sm:$0xff]
  %v904 = vld [vmem:[%s2 + $0x2d8] sm:$0xff]
  %v905 = vld [vmem:[%s2 + $0x2e0] sm:$0xff]
  %v906 = vld [vmem:[%s2 + $0x2e8] sm:$0xff]
  %v907 = vld [vmem:[%s2 + $0x2f0] sm:$0xff]
  %v908 = vld [vmem:[%s2 + $0x2f8] sm:$0xff]
  %v909 = vld [vmem:[%s2 + $0x300] sm:$0xff]
  %v910 = vld [vmem:[%s2 + $0x308] sm:$0xff]
  %v911 = vld [vmem:[%s2 + $0x310] sm:$0xff]
  %v912 = vld [vmem:[%s2 + $0x318] sm:$0xff]
  %v913 = vld [vmem:[%s2 + $0x320] sm:$0xff]
  %v914 = vld [vmem:[%s2 + $0x328] sm:$0xff]
  %v915 = vld [vmem:[%s2 + $0x330] sm:$0xff]
  %v916 = vld [vmem:[%s2 + $0x338] sm:$0xff]
  %v917 = vld [vmem:[%s2 + $0x340] sm:$0xff]
  %v918 = vld [vmem:[%s2 + $0x348] sm:$0xff]
  %v919 = vld [vmem:[%s2 + $0x350] sm:$0xff]
  %v920 = vld [vmem:[%s2 + $0x358] sm:$0xff]
  %v921 = vld [vmem:[%s2 + $0x360] sm:$0xff]
  %v922 = vld [vmem:[%s2 + $0x368] sm:$0xff]
  %v923 = vld [vmem:[%s2 + $0x370] sm:$0xff]
  %v924 = vld [vmem:[%s2 + $0x378] sm:$0xff]
  %v925 = vld [vmem:[%s2 + $0x380] sm:$0xff]
  %v926 = vld [vmem:[%s2 + $0x388] sm:$0xff]
  %v927 = vld [vmem:[%s2 + $0x390] sm:$0xff]
  %v928 = vld [vmem:[%s2 + $0x398] sm:$0xff]
  %v929 = vld [vmem:[%s2 + $0x3a0] sm:$0xff]
  %v930 = vld [vmem:[%s2 + $0x3a8] sm:$0xff]
  %v931 = vld [vmem:[%s2 + $0x3b0] sm:$0xff]
  %v932 = vld [vmem:[%s2 + $0x3b8] sm:$0xff]
  %v933 = vld [vmem:[%s2 + $0x3c0] sm:$0xff]
  %v934 = vld [vmem:[%s2 + $0x3c8] sm:$0xff]
  %v935 = vld [vmem:[%s2 + $0x3d0] sm:$0xff]
  %v936 = vld [vmem:[%s2 + $0x3d8] sm:$0xff]
  %v937 = vld [vmem:[%s2 + $0x3e0] sm:$0xff]
  %v938 = vld [vmem:[%s2 + $0x3e8] sm:$0xff]
  %v939 = vld [vmem:[%s2 + $0x3f0] sm:$0xff]
  %v940 = vld [vmem:[%s2 + $0x3f8] sm:$0xff]
  %v941 = vld [vmem:[%s2 + $0x400] sm:$0xff]
  %v942 = vld [vmem:[%s2 + $0x408] sm:$0xff]
  %v943 = vld [vmem:[%s2 + $0x410] sm:$0xff]
  %v944 = vld [vmem:[%s2 + $0x418] sm:$0xff]
  %v945 = vld [vmem:[%s2 + $0x420] sm:$0xff]
  %v946 = vld [vmem:[%s2 + $0x428] sm:$0xff]
  %v947 = vld [vmem:[%s2 + $0x430] sm:$0xff]
  %v948 = vld [vmem:[%s2 + $0x438] sm:$0xff]
  %v949 = vld [vmem:[%s2 + $0x440] sm:$0xff]
  %v950 = vld [vmem:[%s2 + $0x448] sm:$0xff]
  %v951 = vld [vmem:[%s2 + $0x450] sm:$0xff]
  %v952 = vld [vmem:[%s2 + $0x458] sm:$0xff]
  %v953 = vld [vmem:[%s2 + $0x460] sm:$0xff]
  %v954 = vld [vmem:[%s2 + $0x468] sm:$0xff]
  %v955 = vld [vmem:[%s2 + $0x470] sm:$0xff]
  %v956 = vld [vmem:[%s2 + $0x478] sm:$0xff]
  %957 = vmatprep.subr.mxu0 0.0
  %958 = vmatpush1.msra.mxu0 %v828
  %959 = vmatprep.subr.mxu0 0.0
  %960 = vmatpush1.msra.mxu0 %v827
  %961 = vmatprep.subr.mxu0 0.0
  %962 = vmatpush1.msra.mxu0 %v826
  %963 = vmatprep.subr.mxu0 0.0
  %964 = vmatpush1.msra.mxu0 %v825
  %965 = vmatprep.subr.mxu0 0.0
  %966 = vmatpush1.msra.mxu0 %v824
  %967 = vmatprep.subr.mxu0 0.0
  %968 = vmatpush1.msra.mxu0 %v823
  %969 = vmatprep.subr.mxu0 0.0
  %970 = vmatpush1.msra.mxu0 %v822
  %971 = vmatprep.subr.mxu0 0.0
  %972 = vmatpush1.msra.mxu0 %v821
  %973 = vmatprep.subr.mxu0 0.0
  %974 = vmatpush1.msra.mxu0 %v820
  %975 = vmatprep.subr.mxu0 0.0
  %976 = vmatpush1.msra.mxu0 %v819
  %977 = vmatprep.subr.mxu0 0.0
  %978 = vmatpush1.msra.mxu0 %v818
  %979 = vmatprep.subr.mxu0 0.0
  %980 = vmatpush1.msra.mxu0 %v817
  %981 = vmatprep.subr.mxu0 0.0
  %982 = vmatpush1.msra.mxu0 %v816
  %983 = vmatprep.subr.mxu0 0.0
  %984 = vmatpush1.msra.mxu0 %v815
  %985 = vmatprep.subr.mxu0 0.0
  %986 = vmatpush1.msra.mxu0 %v814
  %987 = vmatprep.subr.mxu0 0.0
  %988 = vmatpush1.msra.mxu0 %v813
  %989 = vmatprep.subr.mxu0 0.0
  %990 = vmatpush2.msra.mxu0 %v844
  %991 = vmatprep.subr.mxu0 0.0
  %992 = vmatpush2.msra.mxu0 %v843
  %993 = vmatprep.subr.mxu0 0.0
  %994 = vmatpush2.msra.mxu0 %v842
  %995 = vmatprep.subr.mxu0 0.0
  %996 = vmatpush2.msra.mxu0 %v841
  %997 = vmatprep.subr.mxu0 0.0
  %998 = vmatpush2.msra.mxu0 %v840
  %999 = vmatprep.subr.mxu0 0.0
  %1000 = vmatpush2.msra.mxu0 %v839
  %1001 = vmatprep.subr.mxu0 0.0
  %1002 = vmatpush2.msra.mxu0 %v838
  %1003 = vmatprep.subr.mxu0 0.0
  %1004 = vmatpush2.msra.mxu0 %v837
  %1005 = vmatprep.subr.mxu0 0.0
  %1006 = vmatpush2.msra.mxu0 %v836
  %1007 = vmatprep.subr.mxu0 0.0
  %1008 = vmatpush2.msra.mxu0 %v835
  %1009 = vmatprep.subr.mxu0 0.0
  %1010 = vmatpush2.msra.mxu0 %v834
  %1011 = vmatprep.subr.mxu0 0.0
  %1012 = vmatpush2.msra.mxu0 %v833
  %1013 = vmatprep.subr.mxu0 0.0
  %1014 = vmatpush2.msra.mxu0 %v832
  %1015 = vmatprep.subr.mxu0 0.0
  %1016 = vmatpush2.msra.mxu0 %v831
  %1017 = vmatprep.subr.mxu0 0.0
  %1018 = vmatpush2.msra.mxu0 %v830
  %1019 = vmatprep.subr.mxu0 0.0
  %1020 = vmatpush2.msra.mxu0 %v829
  %1021 = vmatprep.mubr.f32.mxu0 %v749
  %1022 = vmatmul.mubr.f32.gmra.mxu0 %v760
  %v1023 = vpop.f32.mrf.mxu0
  %v1024 = vadd.f32 0.0, %v1023
  %v1025 = vpop.f32.mrf.mxu0
  %1026 = vmatprep.mubr.f32.mxu0 %v750
  %1027 = vmatmul.mubr.f32.gmra.mxu0 %v761
  %v1028 = vpop.f32.mrf.mxu0
  %v1029 = vadd.f32 0.0, %v1028
  %v1030 = vpop.f32.mrf.mxu0
  %1031 = vdwg.mxu0
  %1032 = vmatprep.subr.mxu0 0.0
  %1033 = vmatpush1.msra.mxu0 %v860
  %1034 = vmatprep.subr.mxu0 0.0
  %1035 = vmatpush1.msra.mxu0 %v859
  %1036 = vmatprep.subr.mxu0 0.0
  %1037 = vmatpush1.msra.mxu0 %v858
  %1038 = vmatprep.subr.mxu0 0.0
  %1039 = vmatpush1.msra.mxu0 %v857
  %1040 = vmatprep.subr.mxu0 0.0
  %1041 = vmatpush1.msra.mxu0 %v856
  %1042 = vmatprep.subr.mxu0 0.0
  %1043 = vmatpush1.msra.mxu0 %v855
  %1044 = vmatprep.subr.mxu0 0.0
  %1045 = vmatpush1.msra.mxu0 %v854
  %1046 = vmatprep.subr.mxu0 0.0
  %1047 = vmatpush1.msra.mxu0 %v853
  %1048 = vmatprep.subr.mxu0 0.0
  %1049 = vmatpush1.msra.mxu0 %v852
  %1050 = vmatprep.subr.mxu0 0.0
  %1051 = vmatpush1.msra.mxu0 %v851
  %1052 = vmatprep.subr.mxu0 0.0
  %1053 = vmatpush1.msra.mxu0 %v850
  %1054 = vmatprep.subr.mxu0 0.0
  %1055 = vmatpush1.msra.mxu0 %v849
  %1056 = vmatprep.subr.mxu0 0.0
  %1057 = vmatpush1.msra.mxu0 %v848
  %1058 = vmatprep.subr.mxu0 0.0
  %1059 = vmatpush1.msra.mxu0 %v847
  %1060 = vmatprep.subr.mxu0 0.0
  %1061 = vmatpush1.msra.mxu0 %v846
  %1062 = vmatprep.subr.mxu0 0.0
  %1063 = vmatpush1.msra.mxu0 %v845
  %1064 = vmatprep.subr.mxu0 0.0
  %1065 = vmatpush2.msra.mxu0 %v876
  %1066 = vmatprep.subr.mxu0 0.0
  %1067 = vmatpush2.msra.mxu0 %v875
  %1068 = vmatprep.subr.mxu0 0.0
  %1069 = vmatpush2.msra.mxu0 %v874
  %1070 = vmatprep.subr.mxu0 0.0
  %1071 = vmatpush2.msra.mxu0 %v873
  %1072 = vmatprep.subr.mxu0 0.0
  %1073 = vmatpush2.msra.mxu0 %v872
  %1074 = vmatprep.subr.mxu0 0.0
  %1075 = vmatpush2.msra.mxu0 %v871
  %1076 = vmatprep.subr.mxu0 0.0
  %1077 = vmatpush2.msra.mxu0 %v870
  %1078 = vmatprep.subr.mxu0 0.0
  %1079 = vmatpush2.msra.mxu0 %v869
  %1080 = vmatprep.subr.mxu0 0.0
  %1081 = vmatpush2.msra.mxu0 %v868
  %1082 = vmatprep.subr.mxu0 0.0
  %1083 = vmatpush2.msra.mxu0 %v867
  %1084 = vmatprep.subr.mxu0 0.0
  %1085 = vmatpush2.msra.mxu0 %v866
  %1086 = vmatprep.subr.mxu0 0.0
  %1087 = vmatpush2.msra.mxu0 %v865
  %1088 = vmatprep.subr.mxu0 0.0
  %1089 = vmatpush2.msra.mxu0 %v864
  %1090 = vmatprep.subr.mxu0 0.0
  %1091 = vmatpush2.msra.mxu0 %v863
  %1092 = vmatprep.subr.mxu0 0.0
  %1093 = vmatpush2.msra.mxu0 %v862
  %1094 = vmatprep.subr.mxu0 0.0
  %1095 = vmatpush2.msra.mxu0 %v861
  %1096 = vmatprep.mubr.f32.mxu0 %v777
  %1097 = vmatmul.mubr.f32.gmra.mxu0 %v769
  %v1098 = vpop.f32.mrf.mxu0
  %v1099 = vadd.f32 %v1024, %v1098
  %v1100 = vpop.f32.mrf.mxu0
  %1101 = vmatprep.mubr.f32.mxu0 %v778
  %1102 = vmatmul.mubr.f32.gmra.mxu0 %v770
  %v1103 = vpop.f32.mrf.mxu0
  %v1104 = vadd.f32 %v1029, %v1103
  %v1105 = vpop.f32.mrf.mxu0
  %1106 = vdwg.mxu0
  %1107 = vmatprep.subr.mxu0 0.0
  %1108 = vmatpush1.msra.mxu0 %v892
  %1109 = vmatprep.subr.mxu0 0.0
  %1110 = vmatpush1.msra.mxu0 %v891
  %1111 = vmatprep.subr.mxu0 0.0
  %1112 = vmatpush1.msra.mxu0 %v890
  %1113 = vmatprep.subr.mxu0 0.0
  %1114 = vmatpush1.msra.mxu0 %v889
  %1115 = vmatprep.subr.mxu0 0.0
  %1116 = vmatpush1.msra.mxu0 %v888
  %1117 = vmatprep.subr.mxu0 0.0
  %1118 = vmatpush1.msra.mxu0 %v887
  %1119 = vmatprep.subr.mxu0 0.0
  %1120 = vmatpush1.msra.mxu0 %v886
  %1121 = vmatprep.subr.mxu0 0.0
  %1122 = vmatpush1.msra.mxu0 %v885
  %1123 = vmatprep.subr.mxu0 0.0
  %1124 = vmatpush1.msra.mxu0 %v884
  %1125 = vmatprep.subr.mxu0 0.0
  %1126 = vmatpush1.msra.mxu0 %v883
  %1127 = vmatprep.subr.mxu0 0.0
  %1128 = vmatpush1.msra.mxu0 %v882
  %1129 = vmatprep.subr.mxu0 0.0
  %1130 = vmatpush1.msra.mxu0 %v881
  %1131 = vmatprep.subr.mxu0 0.0
  %1132 = vmatpush1.msra.mxu0 %v880
  %1133 = vmatprep.subr.mxu0 0.0
  %1134 = vmatpush1.msra.mxu0 %v879
  %1135 = vmatprep.subr.mxu0 0.0
  %1136 = vmatpush1.msra.mxu0 %v878
  %1137 = vmatprep.subr.mxu0 0.0
  %1138 = vmatpush1.msra.mxu0 %v877
  %1139 = vmatprep.subr.mxu0 0.0
  %1140 = vmatpush2.msra.mxu0 %v908
  %1141 = vmatprep.subr.mxu0 0.0
  %1142 = vmatpush2.msra.mxu0 %v907
  %1143 = vmatprep.subr.mxu0 0.0
  %1144 = vmatpush2.msra.mxu0 %v906
  %1145 = vmatprep.subr.mxu0 0.0
  %1146 = vmatpush2.msra.mxu0 %v905
  %1147 = vmatprep.subr.mxu0 0.0
  %1148 = vmatpush2.msra.mxu0 %v904
  %1149 = vmatprep.subr.mxu0 0.0
  %1150 = vmatpush2.msra.mxu0 %v903
  %1151 = vmatprep.subr.mxu0 0.0
  %1152 = vmatpush2.msra.mxu0 %v902
  %1153 = vmatprep.subr.mxu0 0.0
  %1154 = vmatpush2.msra.mxu0 %v901
  %1155 = vmatprep.subr.mxu0 0.0
  %1156 = vmatpush2.msra.mxu0 %v900
  %1157 = vmatprep.subr.mxu0 0.0
  %1158 = vmatpush2.msra.mxu0 %v899
  %1159 = vmatprep.subr.mxu0 0.0
  %1160 = vmatpush2.msra.mxu0 %v898
  %1161 = vmatprep.subr.mxu0 0.0
  %1162 = vmatpush2.msra.mxu0 %v897
  %1163 = vmatprep.subr.mxu0 0.0
  %1164 = vmatpush2.msra.mxu0 %v896
  %1165 = vmatprep.subr.mxu0 0.0
  %1166 = vmatpush2.msra.mxu0 %v895
  %1167 = vmatprep.subr.mxu0 0.0
  %1168 = vmatpush2.msra.mxu0 %v894
  %1169 = vmatprep.subr.mxu0 0.0
  %1170 = vmatpush2.msra.mxu0 %v893
  %1171 = vmatprep.mubr.f32.mxu0 %v785
  %1172 = vmatmul.mubr.f32.gmra.mxu0 %v650
  %v1173 = vpop.f32.mrf.mxu0
  %v1174 = vadd.f32 %v1099, %v1173
  %v1175 = vpop.f32.mrf.mxu0
  %1176 = vmatprep.mubr.f32.mxu0 %v786
  %1177 = vmatmul.mubr.f32.gmra.mxu0 %v651
  %v1178 = vpop.f32.mrf.mxu0
  %v1179 = vadd.f32 %v1104, %v1178
  %v1180 = vpop.f32.mrf.mxu0
  %1181 = vdwg.mxu0
  %1182 = vmatprep.subr.mxu0 0.0
  %1183 = vmatpush1.msra.mxu0 %v924
  %1184 = vmatprep.subr.mxu0 0.0
  %1185 = vmatpush1.msra.mxu0 %v923
  %1186 = vmatprep.subr.mxu0 0.0
  %1187 = vmatpush1.msra.mxu0 %v922
  %1188 = vmatprep.subr.mxu0 0.0
  %1189 = vmatpush1.msra.mxu0 %v921
  %1190 = vmatprep.subr.mxu0 0.0
  %1191 = vmatpush1.msra.mxu0 %v920
  %1192 = vmatprep.subr.mxu0 0.0
  %1193 = vmatpush1.msra.mxu0 %v919
  %1194 = vmatprep.subr.mxu0 0.0
  %1195 = vmatpush1.msra.mxu0 %v918
  %1196 = vmatprep.subr.mxu0 0.0
  %1197 = vmatpush1.msra.mxu0 %v917
  %1198 = vmatprep.subr.mxu0 0.0
  %1199 = vmatpush1.msra.mxu0 %v916
  %1200 = vmatprep.subr.mxu0 0.0
  %1201 = vmatpush1.msra.mxu0 %v915
  %1202 = vmatprep.subr.mxu0 0.0
  %1203 = vmatpush1.msra.mxu0 %v914
  %1204 = vmatprep.subr.mxu0 0.0
  %1205 = vmatpush1.msra.mxu0 %v913
  %1206 = vmatprep.subr.mxu0 0.0
  %1207 = vmatpush1.msra.mxu0 %v912
  %1208 = vmatprep.subr.mxu0 0.0
  %1209 = vmatpush1.msra.mxu0 %v911
  %1210 = vmatprep.subr.mxu0 0.0
  %1211 = vmatpush1.msra.mxu0 %v910
  %1212 = vmatprep.subr.mxu0 0.0
  %1213 = vmatpush1.msra.mxu0 %v909
  %1214 = vmatprep.subr.mxu0 0.0
  %1215 = vmatpush2.msra.mxu0 %v940
  %1216 = vmatprep.subr.mxu0 0.0
  %1217 = vmatpush2.msra.mxu0 %v939
  %1218 = vmatprep.subr.mxu0 0.0
  %1219 = vmatpush2.msra.mxu0 %v938
  %1220 = vmatprep.subr.mxu0 0.0
  %1221 = vmatpush2.msra.mxu0 %v937
  %1222 = vmatprep.subr.mxu0 0.0
  %1223 = vmatpush2.msra.mxu0 %v936
  %1224 = vmatprep.subr.mxu0 0.0
  %1225 = vmatpush2.msra.mxu0 %v935
  %1226 = vmatprep.subr.mxu0 0.0
  %1227 = vmatpush2.msra.mxu0 %v934
  %1228 = vmatprep.subr.mxu0 0.0
  %1229 = vmatpush2.msra.mxu0 %v933
  %1230 = vmatprep.subr.mxu0 0.0
  %1231 = vmatpush2.msra.mxu0 %v932
  %1232 = vmatprep.subr.mxu0 0.0
  %1233 = vmatpush2.msra.mxu0 %v931
  %1234 = vmatprep.subr.mxu0 0.0
  %1235 = vmatpush2.msra.mxu0 %v930
  %1236 = vmatprep.subr.mxu0 0.0
  %1237 = vmatpush2.msra.mxu0 %v929
  %1238 = vmatprep.subr.mxu0 0.0
  %1239 = vmatpush2.msra.mxu0 %v928
  %1240 = vmatprep.subr.mxu0 0.0
  %1241 = vmatpush2.msra.mxu0 %v927
  %1242 = vmatprep.subr.mxu0 0.0
  %1243 = vmatpush2.msra.mxu0 %v926
  %1244 = vmatprep.subr.mxu0 0.0
  %1245 = vmatpush2.msra.mxu0 %v925
  %1246 = vmatprep.mubr.f32.mxu0 %v793
  %1247 = vmatmul.mubr.f32.gmra.mxu0 %v803
  %v1248 = vpop.f32.mrf.mxu0
  %v1249 = vadd.f32 %v1174, %v1248
  %v1250 = vpop.f32.mrf.mxu0
  %1251 = vmatprep.mubr.f32.mxu0 %v794
  %1252 = vmatmul.mubr.f32.gmra.mxu0 %v804
  %v1253 = vpop.f32.mrf.mxu0
  %v1254 = vadd.f32 %v1179, %v1253
  %v1255 = vpop.f32.mrf.mxu0
  %1256 = vdwg.mxu0
  %1257 = vmatprep.subr.mxu0 0.0
  %1258 = vmatpush1.msra.mxu0 %v956
  %1259 = vmatprep.subr.mxu0 0.0
  %1260 = vmatpush1.msra.mxu0 %v955
  %1261 = vmatprep.subr.mxu0 0.0
  %1262 = vmatpush1.msra.mxu0 %v954
  %1263 = vmatprep.subr.mxu0 0.0
  %1264 = vmatpush1.msra.mxu0 %v953
  %1265 = vmatprep.subr.mxu0 0.0
  %1266 = vmatpush1.msra.mxu0 %v952
  %1267 = vmatprep.subr.mxu0 0.0
  %1268 = vmatpush1.msra.mxu0 %v951
  %1269 = vmatprep.subr.mxu0 0.0
  %1270 = vmatpush1.msra.mxu0 %v950
  %1271 = vmatprep.subr.mxu0 0.0
  %1272 = vmatpush1.msra.mxu0 %v949
  %1273 = vmatprep.subr.mxu0 0.0
  %1274 = vmatpush1.msra.mxu0 %v948
  %1275 = vmatprep.subr.mxu0 0.0
  %1276 = vmatpush1.msra.mxu0 %v947
  %1277 = vmatprep.subr.mxu0 0.0
  %1278 = vmatpush1.msra.mxu0 %v946
  %1279 = vmatprep.subr.mxu0 0.0
  %1280 = vmatpush1.msra.mxu0 %v945
  %1281 = vmatprep.subr.mxu0 0.0
  %1282 = vmatpush1.msra.mxu0 %v944
  %1283 = vmatprep.subr.mxu0 0.0
  %1284 = vmatpush1.msra.mxu0 %v943
  %1285 = vmatprep.subr.mxu0 0.0
  %1286 = vmatpush1.msra.mxu0 %v942
  %1287 = vmatprep.subr.mxu0 0.0
  %1288 = vmatpush1.msra.mxu0 %v941
  %1289 = vmatprep.subr.mxu0 0.0
  %1290 = vmatpush2.msra.mxu0 0.0
  %1291 = vmatprep.subr.mxu0 0.0
  %1292 = vmatpush2.msra.mxu0 0.0
  %1293 = vmatprep.subr.mxu0 0.0
  %1294 = vmatpush2.msra.mxu0 0.0
  %1295 = vmatprep.subr.mxu0 0.0
  %1296 = vmatpush2.msra.mxu0 0.0
  %1297 = vmatprep.subr.mxu0 0.0
  %1298 = vmatpush2.msra.mxu0 0.0
  %1299 = vmatprep.subr.mxu0 0.0
  %1300 = vmatpush2.msra.mxu0 0.0
  %1301 = vmatprep.subr.mxu0 0.0
  %1302 = vmatpush2.msra.mxu0 0.0
  %1303 = vmatprep.subr.mxu0 0.0
  %1304 = vmatpush2.msra.mxu0 0.0
  %1305 = vmatprep.subr.mxu0 0.0
  %1306 = vmatpush2.msra.mxu0 0.0
  %1307 = vmatprep.subr.mxu0 0.0
  %1308 = vmatpush2.msra.mxu0 0.0
  %1309 = vmatprep.subr.mxu0 0.0
  %1310 = vmatpush2.msra.mxu0 0.0
  %1311 = vmatprep.subr.mxu0 0.0
  %1312 = vmatpush2.msra.mxu0 0.0
  %1313 = vmatprep.subr.mxu0 0.0
  %1314 = vmatpush2.msra.mxu0 0.0
  %1315 = vmatprep.subr.mxu0 0.0
  %1316 = vmatpush2.msra.mxu0 0.0
  %1317 = vmatprep.subr.mxu0 0.0
  %1318 = vmatpush2.msra.mxu0 0.0
  %1319 = vmatprep.subr.mxu0 0.0
  %1320 = vmatpush2.msra.mxu0 0.0
  %1321 = vmatprep.mubr.f32.mxu0 0.0
  %1322 = vmatmul.mubr.f32.gmra.mxu0 %v811
  %v1323 = vpop.f32.mrf.mxu0
  %v1324 = vadd.f32 %v1249, %v1323
  %v1325 = vpop.f32.mrf.mxu0
  %1326 = vmatprep.mubr.f32.mxu0 0.0
  %1327 = vmatmul.mubr.f32.gmra.mxu0 %v812
  %v1328 = vpop.f32.mrf.mxu0
  %v1329 = vadd.f32 %v1254, %v1328
  %v1330 = vpop.f32.mrf.mxu0
  %1331 = vdwg.mxu0
  %v1332 = vld [vmem:[%s5] sm:$0x1]
  %v1333 = vld [vmem:[%s6] sm:$0x1]
  %1334 = vrot.lane.b32.xlu0 %v1324, 8
  %v1335 = vpop.permute.xlu0 %1334
  %1336 = vrot.lane.b32.xlu0 %v1329, 8
  %v1337 = vpop.permute.xlu0 %1336
  %v1338 = vadd.f32 %v1324, %v1335
  %v1339 = vadd.f32 %v1329, %v1337
  %1340 = vrot.lane.b32.xlu0 %v1338, 16
  %v1341 = vpop.permute.xlu0 %1340
  %1342 = vrot.lane.b32.xlu0 %v1339, 16
  %v1343 = vpop.permute.xlu0 %1342
  %v1344 = vadd.f32 %v1338, %v1341
  %v1345 = vadd.f32 %v1339, %v1343
  %1346 = vrot.lane.b32.xlu0 %v1344, 32
  %v1347 = vpop.permute.xlu0 %1346
  %1348 = vrot.lane.b32.xlu0 %v1345, 32
  %v1349 = vpop.permute.xlu0 %1348
  %v1350 = vadd.f32 %v1344, %v1347
  %v1351 = vadd.f32 %v1345, %v1349
  %1352 = vrot.lane.b32.xlu0 %v1350, 64
  %v1353 = vpop.permute.xlu0 %1352
  %1354 = vrot.lane.b32.xlu0 %v1351, 64
  %v1355 = vpop.permute.xlu0 %1354
  %v1356 = vadd.f32 %v1350, %v1353
  %v1357 = vadd.f32 %v1351, %v1355
  %v1358 = vadd.f32 %v1356, %v1357
  %v1359 = vrot.slane %v1358, 4
  %v1360 = vadd.f32 %v1358, %v1359
  %v1361 = vrot.slane %v1360, 2
  %v1362 = vadd.f32 %v1360, %v1361
  %v1363 = vrot.slane %v1362, 1
  %v1364 = vadd.f32 %v1362, %v1363
  %v1365 = vmul.f32 %v1324, %v1324
  %v1366 = vmul.f32 %v1329, %v1329
  %1367 = vrot.lane.b32.xlu0 %v1365, 8
  %v1368 = vpop.permute.xlu0 %1367
  %1369 = vrot.lane.b32.xlu0 %v1366, 8
  %v1370 = vpop.permute.xlu0 %1369
  %v1371 = vadd.f32 %v1365, %v1368
  %v1372 = vadd.f32 %v1366, %v1370
  %1373 = vrot.lane.b32.xlu0 %v1371, 16
  %v1374 = vpop.permute.xlu0 %1373
  %1375 = vrot.lane.b32.xlu0 %v1372, 16
  %v1376 = vpop.permute.xlu0 %1375
  %v1377 = vadd.f32 %v1371, %v1374
  %v1378 = vadd.f32 %v1372, %v1376
  %1379 = vrot.lane.b32.xlu0 %v1377, 32
  %v1380 = vpop.permute.xlu0 %1379
  %1381 = vrot.lane.b32.xlu0 %v1378, 32
  %v1382 = vpop.permute.xlu0 %1381
  %v1383 = vadd.f32 %v1377, %v1380
  %v1384 = vadd.f32 %v1378, %v1382
  %1385 = vrot.lane.b32.xlu0 %v1383, 64
  %v1386 = vpop.permute.xlu0 %1385
  %1387 = vrot.lane.b32.xlu0 %v1384, 64
  %v1388 = vpop.permute.xlu0 %1387
  %v1389 = vadd.f32 %v1383, %v1386
  %v1390 = vadd.f32 %v1384, %v1388
  %v1391 = vadd.f32 %v1389, %v1390
  %v1392 = vrot.slane %v1391, 4
  %v1393 = vadd.f32 %v1391, %v1392
  %v1394 = vrot.slane %v1393, 2
  %v1395 = vadd.f32 %v1393, %v1394
  %v1396 = vrot.slane %v1395, 1
  %v1397 = vadd.f32 %v1395, %v1396
  %v1398 = vmul.f32 %v1364, 0.00390625
  %v1399 = vmul.f32 %v1397, 0.00390625
  %v1400 = vmul.f32 %v1398, %v1398
  %v1401 = vsub.f32 %v1399, %v1400
  %v1402 = vadd.f32 %v1401, 1e-05
  %v1403 = vrsqrt.pop %v1402
  %v1404 = vmul.f32 %v1403, %v1332
  %v1405 = vsub.f32 %v1324, %v1398
  %v1406 = vsub.f32 %v1329, %v1398
  %v1407 = vlaneseq
  %v1408 = vshrl.u32 %v1407, 7
  %v1409 = vsub.s32 0, %v1408
  %v1410 = vrot.slane %v1404, %v1409
  %v1411 = vmul.f32 %v1405, %v1410
  %v1412 = vmul.f32 %v1406, %v1410
  %v1414 = vlaneseq
  %v1415 = vshrl.u32 %v1414, 7
  %v1416 = vsub.s32 0, %v1415
  %v1417 = vrot.slane %v1333, %v1416
  %v1419 = vadd.f32 %v1411, %v1417
  %v1420 = vadd.f32 %v1412, %v1417
  %v1421 = vadd.f32 %v1419, %v739
  %v1422 = vadd.f32 %v1420, %v740
  %vm1423 = vcmp.gt.f32.partialorder %v1421, 0.0
  %vm1424 = vcmp.gt.f32.partialorder %v1422, 0.0
  %v1425 = vmul.f32 %v1421, 0.2
  %v1426 = vmul.f32 %v1422, 0.2
  %v1427 = vsel %vm1423, %v1421, %v1425
  %v1428 = vsel %vm1424, %v1422, %v1426
  %1429 = vst [vmem:[%s9] sm:$0xff] %v1427
  %1430 = vst [vmem:[%s9 + $0x8] sm:$0xff] %v1428
  // Predicated region
  $region38: #{qy_x_forward.2} parent=0 // pred_check
    _
  $region39: #{qy_x_forward.2} parent=0 // pred_check_branch
    %1432 = sbr.rel (0) target = $region41
  $region40: #{qy_x_forward.2} parent=0 // pred_region
    _
  $region41: #{qy_x_forward.2} parent=0 // pred_fallthru
    _
  // Predicated region
  $region42: #{qy_x_forward.2} parent=0 // pred_check
    _
  $region43: #{qy_x_forward.2} parent=0 // pred_check_branch
    %1434 = sbr.rel (0) target = $region45
  $region44: #{qy_x_forward.2} parent=0 // pred_region
    _
  $region45: #{qy_x_forward.2} parent=0 // pred_fallthru
    _

</llo_original>
